<compile_context>
chip_gen: v7x
topology: tpu7x:2x2x1
jax: 0.10.0
libtpu: 0.0.40
codegen_flags: <defaults>
</compile_context>

<pallas_src>
import math
from functools import partial

import jax
import jax.numpy as jnp
from jax.experimental import pallas as pl
from jax.experimental.pallas import tpu as pltpu


def _round_up(x, m):
    return (x + m - 1) // m * m


def _attention_kernel(xkv_ref, wq_ref, bq_ref, wk_ref, bk_ref, wv_ref, bv_ref,
                      o_ref, k_scratch, v_scratch,
                      *, num_heads, tq, v_head, v_channels, v_out, heads_aligned):
    """One grid step = one (batch element, query tile).

    xkv_ref : (1, S, D)   full sequence (re-fetched only when b changes)       VMEM
    wq/wk   : (H, D, qk_head)  wv : (H, D, v_head)   (per-head W^T slabs; wq pre-scaled)
    bq/bk   : (H, 1, qk_head)  bv : (H, 1, v_head)
    o_ref   : (1, TQ, v_out)   v_out = v_channels padded up to a 128-lane multiple
    k_scratch / v_scratch : (H, S, qk_head) / (H, S, v_head); persist across query tiles.
    """
    qi = pl.program_id(1)

    # K / V projections for the whole sequence: computed once per batch element (first
    # query tile), split per head here (once), and kept resident for the remaining tiles.
    @pl.when(qi == 0)
    def _():
        xkv = xkv_ref[0]                                                      # (S, D)
        for h in range(num_heads):                                            # static unroll
            k = jnp.dot(xkv, wk_ref[h], preferred_element_type=jnp.float32) + bk_ref[h]
            v = jnp.dot(xkv, wv_ref[h], preferred_element_type=jnp.float32) + bv_ref[h]
            k_scratch[h] = k.astype(k_scratch.dtype)
            v_scratch[h] = v.astype(v_scratch.dtype)

    # Query rows of this tile, read straight out of the resident (S, D) block (no extra DMA).
    row0 = pl.multiple_of(qi * tq, tq)
    xq = xkv_ref[0, pl.ds(row0, tq), :]                                       # (TQ, D)

    ctx_heads = []
    for h in range(num_heads):                      # static, unrolled; num_heads is small
        # Q projection per head (scale already folded into wq/bq on the host).
        q = jnp.dot(xq, wq_ref[h], preferred_element_type=jnp.float32) + bq_ref[h]
        qh = q.astype(k_scratch.dtype)                                        # (TQ, hd) bf16
        kh = k_scratch[h]                                                     # (S, hd)  bf16
        vh = v_scratch[h]                                                     # (S, vh)  bf16

        # scores = qh @ kh^T without materializing a transpose: contract last dims of both.
        s = jax.lax.dot_general(qh, kh, (((1,), (1,)), ((), ())),
                                preferred_element_type=jnp.float32)           # (TQ, S) f32
        # Numerically stable softmax (== torch.nn.Softmax(dim=-1)).
        s = s - jnp.max(s, axis=-1, keepdims=True)
        p = jnp.exp(s)
        p = p * pl.reciprocal(jnp.sum(p, axis=-1, keepdims=True), approx=True)

        ctx = jnp.dot(p.astype(vh.dtype), vh,
                      preferred_element_type=jnp.float32)                     # (TQ, vh) f32
        if heads_aligned:
            # 128-aligned per-head slab: store directly, bound live range to one head.
            o_ref[0, :, h * v_head:(h + 1) * v_head] = ctx.astype(o_ref.dtype)
        else:
            ctx_heads.append(ctx)

    if not heads_aligned:
        # permute(0,2,1,3).view(..., H*vh) == per-head slabs side by side; pad the lane dim
        # to a 128 multiple so the single store is unmasked lane-dense.
        ctx_all = jnp.concatenate(ctx_heads, axis=-1)                         # (TQ, v_channels)
        if v_out > v_channels:
            ctx_all = jnp.concatenate(
                [ctx_all, jnp.zeros((tq, v_out - v_channels), ctx_all.dtype)], axis=-1)
        o_ref[0] = ctx_all.astype(o_ref.dtype)

    # TODO(synk): attention_mask / head_mask / dropout(train) / output_attentions /
    # cross-attention inputs are not wired in (module defaults: None / None / eval / False).


def _vmem_budget_bytes(S, D, tq, num_heads, qk_head, v_head, v_out, in_size, cdt_size):
    """Rough per-core VMEM requirement for the chosen tiling (lane-padded, with margin)."""
    lane = 128
    r = _round_up
    kv_scratch = num_heads * S * (r(qk_head, lane) + r(v_head, lane)) * cdt_size
    xkv_bufs = 2 * S * r(D, lane) * in_size                       # double-buffered (1,S,D)
    weights = num_heads * (D + 8) * (2 * r(qk_head, lane) + r(v_head, lane)) * 4
    out_bufs = 2 * tq * r(v_out, lane) * in_size
    temps = 6 * tq * r(S, lane) * 4 + 4 * tq * r(max(D, v_out), lane) * 4
    return kv_scratch + xkv_bufs + weights + out_bufs + temps + (2 << 20)


def perceiver_self_attention(hidden_states, wq, bq, wk, bk, wv, bv, *,
                             num_heads, tq=None, compute_dtype=jnp.bfloat16):
    B, S, D = hidden_states.shape
    qk_channels = wq.shape[0]
    v_channels = wv.shape[0]
    assert qk_channels % num_heads == 0 and v_channels % num_heads == 0
    qk_head = qk_channels // num_heads
    v_head = v_channels // num_heads
    scale = 1.0 / math.sqrt(qk_head)

    in_dt = hidden_states.dtype
    in_size = jnp.dtype(in_dt).itemsize
    cdt_size = jnp.dtype(compute_dtype).itemsize
    sub = 8 * max(1, 4 // in_size)            # sublane quantum: 8 (f32) / 16 (bf16)

    # ---- query tile size: big tiles amortize per-step overhead & feed the MXU an M>=256 ----
    if tq is None:
        if S <= 512:
            tq = S
        else:
            for cand in (512, 256, 128):
                if S % cand == 0:
                    tq = cand
                    break
            else:
                tq = S            # TODO(synk): ragged S -> pad S or masked tail tile
    if S % tq != 0 or (tq != S and tq % sub != 0):
        tq = S                    # guard: (8,128)-incompatible user tq falls back to full S

    # ---- output lane layout (lane-dense stores) ----
    heads_aligned = (v_head % 128 == 0)
    v_out = v_channels if (v_channels % 128 == 0) else _round_up(v_channels, 128)

    # ---- VMEM budget, generation-aware limit (v5e/v6e 128 MiB, v7x 64 MiB) ----
    try:
        vmem_cap = int(pltpu.get_tpu_info().vmem_capacity_bytes)
    except Exception:
        vmem_cap = 64 * 1024 * 1024           # conservative (v7x per-core)
    usable = max(vmem_cap - (8 << 20), 24 << 20)
    budget = _vmem_budget_bytes(S, D, tq, num_heads, qk_head, v_head, v_out, in_size, cdt_size)
    while (budget > usable and tq % 2 == 0 and (tq // 2) % sub == 0 and S % (tq // 2) == 0):
        tq //= 2
        budget = _vmem_budget_bytes(S, D, tq, num_heads, qk_head, v_head, v_out,
                                    in_size, cdt_size)
    # TODO(synk): if the budget still exceeds VMEM (very long S on v7x), a kv-tile grid axis
    # with online softmax (flash-style) is needed so K/V never sit fully resident.
    vmem_limit = int(min(max(budget + budget // 4, 32 << 20), usable))
    num_q_tiles = S // tq

    # ---- host-side layout plumbing (free): per-head W^T slabs, scale folded into Q ----
    wqt = (wq.T * scale).reshape(D, num_heads, qk_head).transpose(1, 0, 2)   # (H, D, hd)
    bqh = (bq * scale).reshape(num_heads, 1, qk_head)                        # (H, 1, hd)
    wkt = wk.T.reshape(D, num_heads, qk_head).transpose(1, 0, 2)
    bkh = bk.reshape(num_heads, 1, qk_head)
    wvt = wv.T.reshape(D, num_heads, v_head).transpose(1, 0, 2)
    bvh = bv.reshape(num_heads, 1, v_head)

    kernel = partial(_attention_kernel, num_heads=num_heads, tq=tq, v_head=v_head,
                     v_channels=v_channels, v_out=v_out, heads_aligned=heads_aligned)

    def const_spec(arr, single_buffer):
        # Grid-invariant parameter: constant index_map, fetched once, never re-DMA'd.
        nd = arr.ndim
        idx = lambda b, qi: (0,) * nd
        if single_buffer:
            return pl.BlockSpec(arr.shape, idx, pipeline_mode=pl.Buffered(1))
        return pl.BlockSpec(arr.shape, idx)

    def build(single_buffer_weights):
        return pl.pallas_call(
            kernel,
            out_shape=jax.ShapeDtypeStruct((B, S, v_out), in_dt),
            grid_spec=pltpu.PrefetchScalarGridSpec(
                num_scalar_prefetch=0,
                grid=(B, num_q_tiles),
                in_specs=[
                    pl.BlockSpec((1, S, D), lambda b, qi: (b, 0, 0)),   # full seq (per batch)
                    const_spec(wqt, single_buffer_weights), const_spec(bqh, single_buffer_weights),
                    const_spec(wkt, single_buffer_weights), const_spec(bkh, single_buffer_weights),
                    const_spec(wvt, single_buffer_weights), const_spec(bvh, single_buffer_weights),
                ],
                out_specs=pl.BlockSpec((1, tq, v_out), lambda b, qi: (b, qi, 0)),
                scratch_shapes=[
                    pltpu.VMEM((num_heads, S, qk_head), compute_dtype),   # K per head
                    pltpu.VMEM((num_heads, S, v_head), compute_dtype),    # V per head
                ],
            ),
            compiler_params=pltpu.CompilerParams(
                # Batch is independent (megacore-shardable); the query-tile axis consumes the
                # per-batch K/V scratch computed at qi == 0, so it must stay sequential.
                # TODO(synk): for B=1 on v7x (2 TCs) a parallel head grid axis would be needed
                # to keep the second core busy.
                dimension_semantics=("parallel", "arbitrary"),
                vmem_limit_bytes=vmem_limit,
            ),
        )

    args = (hidden_states, wqt, bqh, wkt, bkh, wvt, bvh)
    try:
        out = build(True)(*args)
    except Exception:
        # Installed Pallas rejects single-buffered pipeline_mode: fall back to default
        # double-buffered (still grid-invariant, fetched-once) weight specs.
        out = build(False)(*args)

    if v_out != v_channels:
        out = out[..., :v_channels]
    return out


def _reference(hidden_states, wq, bq, wk, bk, wv, bv, *, num_heads):
    """Pure-JAX (f32) reference mirroring the PyTorch forward."""
    B, S, _ = hidden_states.shape
    qk_channels = wq.shape[0]
    v_channels = wv.shape[0]
    qk_head = qk_channels // num_heads
    v_head = v_channels // num_heads

    q = hidden_states @ wq.T + bq
    k = hidden_states @ wk.T + bk
    v = hidden_states @ wv.T + bv

    def split(x, hd):
        return x.reshape(B, S, num_heads, hd).transpose(0, 2, 1, 3)

    qh, kh, vh = split(q, qk_head), split(k, qk_head), split(v, v_head)
    scores = jnp.einsum("bhqd,bhkd->bhqk", qh, kh) / math.sqrt(qk_head)
    probs = jax.nn.softmax(scores, axis=-1)
    ctx = jnp.einsum("bhqk,bhkd->bhqd", probs, vh)
    return ctx.transpose(0, 2, 1, 3).reshape(B, S, num_heads * v_head)


if __name__ == "__main__":
    # Small shapes consistent with the module: q_dim == kv_dim == 32, num_heads = 2.
    B, S, D = 2, 16, 32
    num_heads = 2
    qk_channels = 32   # defaults to q_dim when None
    v_channels = 32    # defaults to qk_channels when None

    key = jax.random.PRNGKey(0)
    kx, kwq, kbq, kwk, kbk, kwv, kbv = jax.random.split(key, 7)

    hidden_states = jax.random.normal(kx, (B, S, D), dtype=jnp.float32)

    # Deterministic synthetic parameters (nn.Linear layout: (out_features, in_features)).
    def lin_init(kw, kb, out_f, in_f):
        bound = 1.0 / math.sqrt(in_f)
        w = jax.random.uniform(kw, (out_f, in_f), jnp.float32, -bound, bound)
        b = jax.random.uniform(kb, (out_f,), jnp.float32, -bound, bound)
        return w, b

    wq, bq = lin_init(kwq, kbq, qk_channels, D)
    wk, bk = lin_init(kwk, kbk, qk_channels, D)
    wv, bv = lin_init(kwv, kbv, v_channels, D)

    # tq=8 exercises the multi-query-tile path (2 tiles / batch element, K/V scratch reuse)
    # and the padded (v_channels=32 -> 128 lanes) output store.
    out = perceiver_self_attention(hidden_states, wq, bq, wk, bk, wv, bv,
                                   num_heads=num_heads, tq=8)
    out = jax.block_until_ready(out)

    ref = _reference(hidden_states, wq, bq, wk, bk, wv, bv, num_heads=num_heads)
    assert out.shape == (B, S, v_channels)
    max_err = float(jnp.max(jnp.abs(out - ref)))
    # Tolerance covers the bf16 K/V/probs compute path (f32 accumulation) and the
    # approximate (EUP) softmax-denominator reciprocal.
    assert jnp.allclose(out, ref, atol=1e-2, rtol=1e-2), \
        f"mismatch vs reference (max abs err {max_err})"

    print("KERNEL_OK")
</pallas_src>

<mosaic_0001>
module attributes {stable_mosaic.version = 11 : i64} {
  func.func @_attention_kernel(%arg0: i32, %arg1: i32, %arg2: memref<1x16x32xf32, #tpu.memory_space<vmem>>, %arg3: memref<2x32x16xf32, #tpu.memory_space<vmem>>, %arg4: memref<2x1x16xf32, #tpu.memory_space<vmem>>, %arg5: memref<2x32x16xf32, #tpu.memory_space<vmem>>, %arg6: memref<2x1x16xf32, #tpu.memory_space<vmem>>, %arg7: memref<2x32x16xf32, #tpu.memory_space<vmem>>, %arg8: memref<2x1x16xf32, #tpu.memory_space<vmem>>, %arg9: memref<1x8x128xf32, #tpu.memory_space<vmem>>, %arg10: memref<2x16x16xbf16, #tpu.memory_space<vmem>>, %arg11: memref<2x16x16xbf16, #tpu.memory_space<vmem>>) attributes {dimension_semantics = [#tpu.dimension_semantics<parallel>, #tpu.dimension_semantics<arbitrary>], iteration_bounds = array<i64: 2, 2>, scalar_prefetch = 0 : i64, scratch_operands = 2 : i64, tpu.core_type = #tpu.core_type<tc>, window_params = [{transform_indices = @transform_0, window_bounds = array<i64: 1, 16, 32>}, {pipeline_mode = #tpu.pipeline_mode<synchronous>, transform_indices = @transform_1, window_bounds = array<i64: 2, 32, 16>}, {pipeline_mode = #tpu.pipeline_mode<synchronous>, transform_indices = @transform_2, window_bounds = array<i64: 2, 1, 16>}, {pipeline_mode = #tpu.pipeline_mode<synchronous>, transform_indices = @transform_3, window_bounds = array<i64: 2, 32, 16>}, {pipeline_mode = #tpu.pipeline_mode<synchronous>, transform_indices = @transform_4, window_bounds = array<i64: 2, 1, 16>}, {pipeline_mode = #tpu.pipeline_mode<synchronous>, transform_indices = @transform_5, window_bounds = array<i64: 2, 32, 16>}, {pipeline_mode = #tpu.pipeline_mode<synchronous>, transform_indices = @transform_6, window_bounds = array<i64: 2, 1, 16>}, {transform_indices = @transform_7, window_bounds = array<i64: 1, 8, 128>}]} {
    %c0_i32 = arith.constant 0 : i32
    %0 = arith.cmpi eq, %arg1, %c0_i32 : i32
    %1 = arith.extui %0 : i1 to i32
    %c0_i32_0 = arith.constant 0 : i32
    %2 = arith.cmpi ne, %1, %c0_i32_0 : i32
    scf.if %2 {
      %c0_38 = arith.constant 0 : index
      %c0_39 = arith.constant 0 : index
      %c0_40 = arith.constant 0 : index
      %64 = vector.load %arg2[%c0_38, %c0_39, %c0_40] : memref<1x16x32xf32, #tpu.memory_space<vmem>>, vector<1x16x32xf32>
      %65 = vector.shape_cast %64 : vector<1x16x32xf32> to vector<16x32xf32>
      %c0_41 = arith.constant 0 : index
      %c0_42 = arith.constant 0 : index
      %c0_43 = arith.constant 0 : index
      %66 = vector.load %arg5[%c0_41, %c0_42, %c0_43] : memref<2x32x16xf32, #tpu.memory_space<vmem>>, vector<1x32x16xf32>
      %67 = vector.shape_cast %66 : vector<1x32x16xf32> to vector<32x16xf32>
      %cst_44 = arith.constant dense<0.000000e+00> : vector<16x16xf32>
      %68 = tpu.matmul %65, %67, %cst_44 {dimension_numbers = #tpu.dot_dimension_numbers<[1], [0], [0], [1], [0, 0, 1, 1], [], []>} : vector<16x32xf32>, vector<32x16xf32>, vector<16x16xf32> -> vector<16x16xf32>
      %c0_45 = arith.constant 0 : index
      %c0_46 = arith.constant 0 : index
      %c0_47 = arith.constant 0 : index
      %69 = vector.load %arg6[%c0_45, %c0_46, %c0_47] : memref<2x1x16xf32, #tpu.memory_space<vmem>>, vector<1x1x16xf32>
      %70 = vector.shape_cast %69 : vector<1x1x16xf32> to vector<1x16xf32>
      %71 = vector.broadcast %70 : vector<1x16xf32> to vector<16x16xf32>
      %72 = arith.addf %68, %71 : vector<16x16xf32>
      %c0_48 = arith.constant 0 : index
      %c0_49 = arith.constant 0 : index
      %c0_50 = arith.constant 0 : index
      %73 = vector.load %arg7[%c0_48, %c0_49, %c0_50] : memref<2x32x16xf32, #tpu.memory_space<vmem>>, vector<1x32x16xf32>
      %74 = vector.shape_cast %73 : vector<1x32x16xf32> to vector<32x16xf32>
      %cst_51 = arith.constant dense<0.000000e+00> : vector<16x16xf32>
      %75 = tpu.matmul %65, %74, %cst_51 {dimension_numbers = #tpu.dot_dimension_numbers<[1], [0], [0], [1], [0, 0, 1, 1], [], []>} : vector<16x32xf32>, vector<32x16xf32>, vector<16x16xf32> -> vector<16x16xf32>
      %c0_52 = arith.constant 0 : index
      %c0_53 = arith.constant 0 : index
      %c0_54 = arith.constant 0 : index
      %76 = vector.load %arg8[%c0_52, %c0_53, %c0_54] : memref<2x1x16xf32, #tpu.memory_space<vmem>>, vector<1x1x16xf32>
      %77 = vector.shape_cast %76 : vector<1x1x16xf32> to vector<1x16xf32>
      %78 = vector.broadcast %77 : vector<1x16xf32> to vector<16x16xf32>
      %79 = arith.addf %75, %78 : vector<16x16xf32>
      %80 = arith.truncf %72 : vector<16x16xf32> to vector<16x16xbf16>
      %c0_55 = arith.constant 0 : index
      %c0_56 = arith.constant 0 : index
      %c0_57 = arith.constant 0 : index
      %81 = vector.load %arg10[%c0_55, %c0_56, %c0_57] : memref<2x16x16xbf16, #tpu.memory_space<vmem>>, vector<1x16x16xbf16>
      %82 = vector.shape_cast %81 : vector<1x16x16xbf16> to vector<16x16xbf16>
      %83 = vector.shape_cast %80 : vector<16x16xbf16> to vector<1x16x16xbf16>
      tpu.vector_store %arg10[%c0_55, %c0_56, %c0_57], %83 {strides = array<i32>} : memref<2x16x16xbf16, #tpu.memory_space<vmem>>, vector<1x16x16xbf16>,
      %84 = arith.truncf %79 : vector<16x16xf32> to vector<16x16xbf16>
      %c0_58 = arith.constant 0 : index
      %c0_59 = arith.constant 0 : index
      %c0_60 = arith.constant 0 : index
      %85 = vector.load %arg11[%c0_58, %c0_59, %c0_60] : memref<2x16x16xbf16, #tpu.memory_space<vmem>>, vector<1x16x16xbf16>
      %86 = vector.shape_cast %85 : vector<1x16x16xbf16> to vector<16x16xbf16>
      %87 = vector.shape_cast %84 : vector<16x16xbf16> to vector<1x16x16xbf16>
      tpu.vector_store %arg11[%c0_58, %c0_59, %c0_60], %87 {strides = array<i32>} : memref<2x16x16xbf16, #tpu.memory_space<vmem>>, vector<1x16x16xbf16>,
      %c1_61 = arith.constant 1 : index
      %c0_62 = arith.constant 0 : index
      %c0_63 = arith.constant 0 : index
      %88 = vector.load %arg5[%c1_61, %c0_62, %c0_63] : memref<2x32x16xf32, #tpu.memory_space<vmem>>, vector<1x32x16xf32>
      %89 = vector.shape_cast %88 : vector<1x32x16xf32> to vector<32x16xf32>
      %cst_64 = arith.constant dense<0.000000e+00> : vector<16x16xf32>
      %90 = tpu.matmul %65, %89, %cst_64 {dimension_numbers = #tpu.dot_dimension_numbers<[1], [0], [0], [1], [0, 0, 1, 1], [], []>} : vector<16x32xf32>, vector<32x16xf32>, vector<16x16xf32> -> vector<16x16xf32>
      %c1_65 = arith.constant 1 : index
      %c0_66 = arith.constant 0 : index
      %c0_67 = arith.constant 0 : index
      %91 = vector.load %arg6[%c1_65, %c0_66, %c0_67] : memref<2x1x16xf32, #tpu.memory_space<vmem>>, vector<1x1x16xf32>
      %92 = vector.shape_cast %91 : vector<1x1x16xf32> to vector<1x16xf32>
      %93 = vector.broadcast %92 : vector<1x16xf32> to vector<16x16xf32>
      %94 = arith.addf %90, %93 : vector<16x16xf32>
      %c1_68 = arith.constant 1 : index
      %c0_69 = arith.constant 0 : index
      %c0_70 = arith.constant 0 : index
      %95 = vector.load %arg7[%c1_68, %c0_69, %c0_70] : memref<2x32x16xf32, #tpu.memory_space<vmem>>, vector<1x32x16xf32>
      %96 = vector.shape_cast %95 : vector<1x32x16xf32> to vector<32x16xf32>
      %cst_71 = arith.constant dense<0.000000e+00> : vector<16x16xf32>
      %97 = tpu.matmul %65, %96, %cst_71 {dimension_numbers = #tpu.dot_dimension_numbers<[1], [0], [0], [1], [0, 0, 1, 1], [], []>} : vector<16x32xf32>, vector<32x16xf32>, vector<16x16xf32> -> vector<16x16xf32>
      %c1_72 = arith.constant 1 : index
      %c0_73 = arith.constant 0 : index
      %c0_74 = arith.constant 0 : index
      %98 = vector.load %arg8[%c1_72, %c0_73, %c0_74] : memref<2x1x16xf32, #tpu.memory_space<vmem>>, vector<1x1x16xf32>
      %99 = vector.shape_cast %98 : vector<1x1x16xf32> to vector<1x16xf32>
      %100 = vector.broadcast %99 : vector<1x16xf32> to vector<16x16xf32>
      %101 = arith.addf %97, %100 : vector<16x16xf32>
      %102 = arith.truncf %94 : vector<16x16xf32> to vector<16x16xbf16>
      %c1_75 = arith.constant 1 : index
      %c0_76 = arith.constant 0 : index
      %c0_77 = arith.constant 0 : index
      %103 = vector.load %arg10[%c1_75, %c0_76, %c0_77] : memref<2x16x16xbf16, #tpu.memory_space<vmem>>, vector<1x16x16xbf16>
      %104 = vector.shape_cast %103 : vector<1x16x16xbf16> to vector<16x16xbf16>
      %105 = vector.shape_cast %102 : vector<16x16xbf16> to vector<1x16x16xbf16>
      tpu.vector_store %arg10[%c1_75, %c0_76, %c0_77], %105 {strides = array<i32>} : memref<2x16x16xbf16, #tpu.memory_space<vmem>>, vector<1x16x16xbf16>,
      %106 = arith.truncf %101 : vector<16x16xf32> to vector<16x16xbf16>
      %c1_78 = arith.constant 1 : index
      %c0_79 = arith.constant 0 : index
      %c0_80 = arith.constant 0 : index
      %107 = vector.load %arg11[%c1_78, %c0_79, %c0_80] : memref<2x16x16xbf16, #tpu.memory_space<vmem>>, vector<1x16x16xbf16>
      %108 = vector.shape_cast %107 : vector<1x16x16xbf16> to vector<16x16xbf16>
      %109 = vector.shape_cast %106 : vector<16x16xbf16> to vector<1x16x16xbf16>
      tpu.vector_store %arg11[%c1_78, %c0_79, %c0_80], %109 {strides = array<i32>} : memref<2x16x16xbf16, #tpu.memory_space<vmem>>, vector<1x16x16xbf16>,
    } else {
    }
    %c8_i32 = arith.constant 8 : i32
    %3 = arith.muli %arg1, %c8_i32 : i32
    %4 = tpu.assume_multiple %3, 8 : i32
    %c0 = arith.constant 0 : index
    %5 = arith.index_cast %4 : i32 to index
    %c0_1 = arith.constant 0 : index
    %6 = vector.load %arg2[%c0, %5, %c0_1] : memref<1x16x32xf32, #tpu.memory_space<vmem>>, vector<1x8x32xf32>
    %7 = vector.shape_cast %6 : vector<1x8x32xf32> to vector<8x32xf32>
    %c0_2 = arith.constant 0 : index
    %c0_3 = arith.constant 0 : index
    %c0_4 = arith.constant 0 : index
    %8 = vector.load %arg3[%c0_2, %c0_3, %c0_4] : memref<2x32x16xf32, #tpu.memory_space<vmem>>, vector<1x32x16xf32>
    %9 = vector.shape_cast %8 : vector<1x32x16xf32> to vector<32x16xf32>
    %cst = arith.constant dense<0.000000e+00> : vector<8x16xf32>
    %10 = tpu.matmul %7, %9, %cst {dimension_numbers = #tpu.dot_dimension_numbers<[1], [0], [0], [1], [0, 0, 1, 1], [], []>} : vector<8x32xf32>, vector<32x16xf32>, vector<8x16xf32> -> vector<8x16xf32>
    %c0_5 = arith.constant 0 : index
    %c0_6 = arith.constant 0 : index
    %c0_7 = arith.constant 0 : index
    %11 = vector.load %arg4[%c0_5, %c0_6, %c0_7] : memref<2x1x16xf32, #tpu.memory_space<vmem>>, vector<1x1x16xf32>
    %12 = vector.shape_cast %11 : vector<1x1x16xf32> to vector<1x16xf32>
    %13 = vector.broadcast %12 : vector<1x16xf32> to vector<8x16xf32>
    %14 = arith.addf %10, %13 : vector<8x16xf32>
    %15 = arith.truncf %14 : vector<8x16xf32> to vector<8x16xbf16>
    %c0_8 = arith.constant 0 : index
    %c0_9 = arith.constant 0 : index
    %c0_10 = arith.constant 0 : index
    %16 = vector.load %arg10[%c0_8, %c0_9, %c0_10] : memref<2x16x16xbf16, #tpu.memory_space<vmem>>, vector<1x16x16xbf16>
    %17 = vector.shape_cast %16 : vector<1x16x16xbf16> to vector<16x16xbf16>
    %c0_11 = arith.constant 0 : index
    %c0_12 = arith.constant 0 : index
    %c0_13 = arith.constant 0 : index
    %18 = vector.load %arg11[%c0_11, %c0_12, %c0_13] : memref<2x16x16xbf16, #tpu.memory_space<vmem>>, vector<1x16x16xbf16>
    %19 = vector.shape_cast %18 : vector<1x16x16xbf16> to vector<16x16xbf16>
    %cst_14 = arith.constant dense<0.000000e+00> : vector<8x16xf32>
    %20 = tpu.matmul %15, %17, %cst_14 {dimension_numbers = #tpu.dot_dimension_numbers<[1], [1], [0], [0], [0, 0, 1, 0], [], []>} : vector<8x16xbf16>, vector<16x16xbf16>, vector<8x16xf32> -> vector<8x16xf32>
    %cst_15 = arith.constant dense<0xFF800000> : vector<8xf32>
    %21 = vector.multi_reduction <maximumf>, %20, %cst_15 [1] : vector<8x16xf32> to vector<8xf32>
    %22 = vector.shape_cast %21 : vector<8xf32> to vector<8x1xf32>
    %23 = vector.broadcast %22 : vector<8x1xf32> to vector<8x16xf32>
    %24 = arith.subf %20, %23 : vector<8x16xf32>
    %25 = math.exp %24 : vector<8x16xf32>
    %cst_16 = arith.constant dense<0.000000e+00> : vector<8xf32>
    %26 = vector.multi_reduction <add>, %25, %cst_16 [1] : vector<8x16xf32> to vector<8xf32>
    %27 = vector.shape_cast %26 : vector<8xf32> to vector<8x1xf32>
    %28 = tpu.reciprocal %27 {approx = true} : vector<8x1xf32> -> vector<8x1xf32>
    %29 = vector.broadcast %28 : vector<8x1xf32> to vector<8x16xf32>
    %30 = arith.mulf %25, %29 : vector<8x16xf32>
    %31 = arith.truncf %30 : vector<8x16xf32> to vector<8x16xbf16>
    %cst_17 = arith.constant dense<0.000000e+00> : vector<8x16xf32>
    %32 = tpu.matmul %31, %19, %cst_17 {dimension_numbers = #tpu.dot_dimension_numbers<[1], [0], [0], [1], [0, 0, 1, 1], [], []>} : vector<8x16xbf16>, vector<16x16xbf16>, vector<8x16xf32> -> vector<8x16xf32>
    %c1 = arith.constant 1 : index
    %c0_18 = arith.constant 0 : index
    %c0_19 = arith.constant 0 : index
    %33 = vector.load %arg3[%c1, %c0_18, %c0_19] : memref<2x32x16xf32, #tpu.memory_space<vmem>>, vector<1x32x16xf32>
    %34 = vector.shape_cast %33 : vector<1x32x16xf32> to vector<32x16xf32>
    %cst_20 = arith.constant dense<0.000000e+00> : vector<8x16xf32>
    %35 = tpu.matmul %7, %34, %cst_20 {dimension_numbers = #tpu.dot_dimension_numbers<[1], [0], [0], [1], [0, 0, 1, 1], [], []>} : vector<8x32xf32>, vector<32x16xf32>, vector<8x16xf32> -> vector<8x16xf32>
    %c1_21 = arith.constant 1 : index
    %c0_22 = arith.constant 0 : index
    %c0_23 = arith.constant 0 : index
    %36 = vector.load %arg4[%c1_21, %c0_22, %c0_23] : memref<2x1x16xf32, #tpu.memory_space<vmem>>, vector<1x1x16xf32>
    %37 = vector.shape_cast %36 : vector<1x1x16xf32> to vector<1x16xf32>
    %38 = vector.broadcast %37 : vector<1x16xf32> to vector<8x16xf32>
    %39 = arith.addf %35, %38 : vector<8x16xf32>
    %40 = arith.truncf %39 : vector<8x16xf32> to vector<8x16xbf16>
    %c1_24 = arith.constant 1 : index
    %c0_25 = arith.constant 0 : index
    %c0_26 = arith.constant 0 : index
    %41 = vector.load %arg10[%c1_24, %c0_25, %c0_26] : memref<2x16x16xbf16, #tpu.memory_space<vmem>>, vector<1x16x16xbf16>
    %42 = vector.shape_cast %41 : vector<1x16x16xbf16> to vector<16x16xbf16>
    %c1_27 = arith.constant 1 : index
    %c0_28 = arith.constant 0 : index
    %c0_29 = arith.constant 0 : index
    %43 = vector.load %arg11[%c1_27, %c0_28, %c0_29] : memref<2x16x16xbf16, #tpu.memory_space<vmem>>, vector<1x16x16xbf16>
    %44 = vector.shape_cast %43 : vector<1x16x16xbf16> to vector<16x16xbf16>
    %cst_30 = arith.constant dense<0.000000e+00> : vector<8x16xf32>
    %45 = tpu.matmul %40, %42, %cst_30 {dimension_numbers = #tpu.dot_dimension_numbers<[1], [1], [0], [0], [0, 0, 1, 0], [], []>} : vector<8x16xbf16>, vector<16x16xbf16>, vector<8x16xf32> -> vector<8x16xf32>
    %cst_31 = arith.constant dense<0xFF800000> : vector<8xf32>
    %46 = vector.multi_reduction <maximumf>, %45, %cst_31 [1] : vector<8x16xf32> to vector<8xf32>
    %47 = vector.shape_cast %46 : vector<8xf32> to vector<8x1xf32>
    %48 = vector.broadcast %47 : vector<8x1xf32> to vector<8x16xf32>
    %49 = arith.subf %45, %48 : vector<8x16xf32>
    %50 = math.exp %49 : vector<8x16xf32>
    %cst_32 = arith.constant dense<0.000000e+00> : vector<8xf32>
    %51 = vector.multi_reduction <add>, %50, %cst_32 [1] : vector<8x16xf32> to vector<8xf32>
    %52 = vector.shape_cast %51 : vector<8xf32> to vector<8x1xf32>
    %53 = tpu.reciprocal %52 {approx = true} : vector<8x1xf32> -> vector<8x1xf32>
    %54 = vector.broadcast %53 : vector<8x1xf32> to vector<8x16xf32>
    %55 = arith.mulf %50, %54 : vector<8x16xf32>
    %56 = arith.truncf %55 : vector<8x16xf32> to vector<8x16xbf16>
    %cst_33 = arith.constant dense<0.000000e+00> : vector<8x16xf32>
    %57 = tpu.matmul %56, %44, %cst_33 {dimension_numbers = #tpu.dot_dimension_numbers<[1], [0], [0], [1], [0, 0, 1, 1], [], []>} : vector<8x16xbf16>, vector<16x16xbf16>, vector<8x16xf32> -> vector<8x16xf32>
    %58 = tpu.concatenate %32, %57 in 1 : vector<8x16xf32>, vector<8x16xf32> -> vector<8x32xf32>
    %cst_34 = arith.constant 0.000000e+00 : f32
    %59 = vector.broadcast %cst_34 : f32 to vector<8x96xf32>
    %60 = tpu.concatenate %58, %59 in 1 : vector<8x32xf32>, vector<8x96xf32> -> vector<8x128xf32>
    %c0_35 = arith.constant 0 : index
    %c0_36 = arith.constant 0 : index
    %c0_37 = arith.constant 0 : index
    %61 = vector.load %arg9[%c0_35, %c0_36, %c0_37] : memref<1x8x128xf32, #tpu.memory_space<vmem>>, vector<1x8x128xf32>
    %62 = vector.shape_cast %61 : vector<1x8x128xf32> to vector<8x128xf32>
    %63 = vector.shape_cast %60 : vector<8x128xf32> to vector<1x8x128xf32>
    tpu.vector_store %arg9[%c0_35, %c0_36, %c0_37], %63 {strides = array<i32>} : memref<1x8x128xf32, #tpu.memory_space<vmem>>, vector<1x8x128xf32>,
    return
  }
  func.func @transform_0(%arg0: i32, %arg1: i32) -> (i32, i32, i32) {
    %c0_i32 = arith.constant 0 : i32
    %c0_i32_0 = arith.constant 0 : i32
    %c0_i32_1 = arith.constant 0 : i32
    return %arg0, %c0_i32, %c0_i32_0 : i32, i32, i32
  }
  func.func @transform_1(%arg0: i32, %arg1: i32) -> (i32, i32, i32) {
    %c0_i32 = arith.constant 0 : i32
    %c0_i32_0 = arith.constant 0 : i32
    %c0_i32_1 = arith.constant 0 : i32
    %c0_i32_2 = arith.constant 0 : i32
    return %c0_i32, %c0_i32_0, %c0_i32_1 : i32, i32, i32
  }
  func.func @transform_2(%arg0: i32, %arg1: i32) -> (i32, i32, i32) {
    %c0_i32 = arith.constant 0 : i32
    %c0_i32_0 = arith.constant 0 : i32
    %c0_i32_1 = arith.constant 0 : i32
    %c0_i32_2 = arith.constant 0 : i32
    return %c0_i32, %c0_i32_0, %c0_i32_1 : i32, i32, i32
  }
  func.func @transform_3(%arg0: i32, %arg1: i32) -> (i32, i32, i32) {
    %c0_i32 = arith.constant 0 : i32
    %c0_i32_0 = arith.constant 0 : i32
    %c0_i32_1 = arith.constant 0 : i32
    %c0_i32_2 = arith.constant 0 : i32
    return %c0_i32, %c0_i32_0, %c0_i32_1 : i32, i32, i32
  }
  func.func @transform_4(%arg0: i32, %arg1: i32) -> (i32, i32, i32) {
    %c0_i32 = arith.constant 0 : i32
    %c0_i32_0 = arith.constant 0 : i32
    %c0_i32_1 = arith.constant 0 : i32
    %c0_i32_2 = arith.constant 0 : i32
    return %c0_i32, %c0_i32_0, %c0_i32_1 : i32, i32, i32
  }
  func.func @transform_5(%arg0: i32, %arg1: i32) -> (i32, i32, i32) {
    %c0_i32 = arith.constant 0 : i32
    %c0_i32_0 = arith.constant 0 : i32
    %c0_i32_1 = arith.constant 0 : i32
    %c0_i32_2 = arith.constant 0 : i32
    return %c0_i32, %c0_i32_0, %c0_i32_1 : i32, i32, i32
  }
  func.func @transform_6(%arg0: i32, %arg1: i32) -> (i32, i32, i32) {
    %c0_i32 = arith.constant 0 : i32
    %c0_i32_0 = arith.constant 0 : i32
    %c0_i32_1 = arith.constant 0 : i32
    %c0_i32_2 = arith.constant 0 : i32
    return %c0_i32, %c0_i32_0, %c0_i32_1 : i32, i32, i32
  }
  func.func @transform_7(%arg0: i32, %arg1: i32) -> (i32, i32, i32) {
    %c0_i32 = arith.constant 0 : i32
    %c0_i32_0 = arith.constant 0 : i32
    return %arg0, %arg1, %c0_i32 : i32, i32, i32
  }
}

module attributes {stable_mosaic.version = 11 : i64} {
  func.func @_attention_kernel(%arg0: i32, %arg1: i32, %arg2: memref<1x16x32xf32, #tpu.memory_space<vmem>>, %arg3: memref<2x32x16xf32, #tpu.memory_space<vmem>>, %arg4: memref<2x1x16xf32, #tpu.memory_space<vmem>>, %arg5: memref<2x32x16xf32, #tpu.memory_space<vmem>>, %arg6: memref<2x1x16xf32, #tpu.memory_space<vmem>>, %arg7: memref<2x32x16xf32, #tpu.memory_space<vmem>>, %arg8: memref<2x1x16xf32, #tpu.memory_space<vmem>>, %arg9: memref<1x8x128xf32, #tpu.memory_space<vmem>>, %arg10: memref<2x16x16xbf16, #tpu.memory_space<vmem>>, %arg11: memref<2x16x16xbf16, #tpu.memory_space<vmem>>) attributes {dimension_semantics = [#tpu.dimension_semantics<parallel>, #tpu.dimension_semantics<arbitrary>], iteration_bounds = array<i64: 2, 2>, scalar_prefetch = 0 : i64, scratch_operands = 2 : i64, tpu.core_type = #tpu.core_type<tc>, window_params = [{transform_indices = @transform_0, window_bounds = array<i64: 1, 16, 32>}, {pipeline_mode = #tpu.pipeline_mode<synchronous>, transform_indices = @transform_1, window_bounds = array<i64: 2, 32, 16>}, {pipeline_mode = #tpu.pipeline_mode<synchronous>, transform_indices = @transform_2, window_bounds = array<i64: 2, 1, 16>}, {pipeline_mode = #tpu.pipeline_mode<synchronous>, transform_indices = @transform_3, window_bounds = array<i64: 2, 32, 16>}, {pipeline_mode = #tpu.pipeline_mode<synchronous>, transform_indices = @transform_4, window_bounds = array<i64: 2, 1, 16>}, {pipeline_mode = #tpu.pipeline_mode<synchronous>, transform_indices = @transform_5, window_bounds = array<i64: 2, 32, 16>}, {pipeline_mode = #tpu.pipeline_mode<synchronous>, transform_indices = @transform_6, window_bounds = array<i64: 2, 1, 16>}, {transform_indices = @transform_7, window_bounds = array<i64: 1, 8, 128>}]} {
    %c0_i32 = arith.constant 0 : i32
    %0 = arith.cmpi eq, %arg1, %c0_i32 : i32
    %1 = arith.extui %0 : i1 to i32
    %c0_i32_0 = arith.constant 0 : i32
    %2 = arith.cmpi ne, %1, %c0_i32_0 : i32
    scf.if %2 {
      %c0_38 = arith.constant 0 : index
      %c0_39 = arith.constant 0 : index
      %c0_40 = arith.constant 0 : index
      %64 = vector.load %arg2[%c0_38, %c0_39, %c0_40] : memref<1x16x32xf32, #tpu.memory_space<vmem>>, vector<1x16x32xf32>
      %65 = vector.shape_cast %64 : vector<1x16x32xf32> to vector<16x32xf32>
      %c0_41 = arith.constant 0 : index
      %c0_42 = arith.constant 0 : index
      %c0_43 = arith.constant 0 : index
      %66 = vector.load %arg5[%c0_41, %c0_42, %c0_43] : memref<2x32x16xf32, #tpu.memory_space<vmem>>, vector<1x32x16xf32>
      %67 = vector.shape_cast %66 : vector<1x32x16xf32> to vector<32x16xf32>
      %cst_44 = arith.constant dense<0.000000e+00> : vector<16x16xf32>
      %68 = tpu.matmul %65, %67, %cst_44 {dimension_numbers = #tpu.dot_dimension_numbers<[1], [0], [0], [1], [0, 0, 1, 1], [], []>} : vector<16x32xf32>, vector<32x16xf32>, vector<16x16xf32> -> vector<16x16xf32>
      %c0_45 = arith.constant 0 : index
      %c0_46 = arith.constant 0 : index
      %c0_47 = arith.constant 0 : index
      %69 = vector.load %arg6[%c0_45, %c0_46, %c0_47] : memref<2x1x16xf32, #tpu.memory_space<vmem>>, vector<1x1x16xf32>
      %70 = vector.shape_cast %69 : vector<1x1x16xf32> to vector<1x16xf32>
      %71 = vector.broadcast %70 : vector<1x16xf32> to vector<16x16xf32>
      %72 = arith.addf %68, %71 : vector<16x16xf32>
      %c0_48 = arith.constant 0 : index
      %c0_49 = arith.constant 0 : index
      %c0_50 = arith.constant 0 : index
      %73 = vector.load %arg7[%c0_48, %c0_49, %c0_50] : memref<2x32x16xf32, #tpu.memory_space<vmem>>, vector<1x32x16xf32>
      %74 = vector.shape_cast %73 : vector<1x32x16xf32> to vector<32x16xf32>
      %cst_51 = arith.constant dense<0.000000e+00> : vector<16x16xf32>
      %75 = tpu.matmul %65, %74, %cst_51 {dimension_numbers = #tpu.dot_dimension_numbers<[1], [0], [0], [1], [0, 0, 1, 1], [], []>} : vector<16x32xf32>, vector<32x16xf32>, vector<16x16xf32> -> vector<16x16xf32>
      %c0_52 = arith.constant 0 : index
      %c0_53 = arith.constant 0 : index
      %c0_54 = arith.constant 0 : index
      %76 = vector.load %arg8[%c0_52, %c0_53, %c0_54] : memref<2x1x16xf32, #tpu.memory_space<vmem>>, vector<1x1x16xf32>
      %77 = vector.shape_cast %76 : vector<1x1x16xf32> to vector<1x16xf32>
      %78 = vector.broadcast %77 : vector<1x16xf32> to vector<16x16xf32>
      %79 = arith.addf %75, %78 : vector<16x16xf32>
      %80 = arith.truncf %72 : vector<16x16xf32> to vector<16x16xbf16>
      %c0_55 = arith.constant 0 : index
      %c0_56 = arith.constant 0 : index
      %c0_57 = arith.constant 0 : index
      %81 = vector.load %arg10[%c0_55, %c0_56, %c0_57] : memref<2x16x16xbf16, #tpu.memory_space<vmem>>, vector<1x16x16xbf16>
      %82 = vector.shape_cast %81 : vector<1x16x16xbf16> to vector<16x16xbf16>
      %83 = vector.shape_cast %80 : vector<16x16xbf16> to vector<1x16x16xbf16>
      tpu.vector_store %arg10[%c0_55, %c0_56, %c0_57], %83 {strides = array<i32>} : memref<2x16x16xbf16, #tpu.memory_space<vmem>>, vector<1x16x16xbf16>,
      %84 = arith.truncf %79 : vector<16x16xf32> to vector<16x16xbf16>
      %c0_58 = arith.constant 0 : index
      %c0_59 = arith.constant 0 : index
      %c0_60 = arith.constant 0 : index
      %85 = vector.load %arg11[%c0_58, %c0_59, %c0_60] : memref<2x16x16xbf16, #tpu.memory_space<vmem>>, vector<1x16x16xbf16>
      %86 = vector.shape_cast %85 : vector<1x16x16xbf16> to vector<16x16xbf16>
      %87 = vector.shape_cast %84 : vector<16x16xbf16> to vector<1x16x16xbf16>
      tpu.vector_store %arg11[%c0_58, %c0_59, %c0_60], %87 {strides = array<i32>} : memref<2x16x16xbf16, #tpu.memory_space<vmem>>, vector<1x16x16xbf16>,
      %c1_61 = arith.constant 1 : index
      %c0_62 = arith.constant 0 : index
      %c0_63 = arith.constant 0 : index
      %88 = vector.load %arg5[%c1_61, %c0_62, %c0_63] : memref<2x32x16xf32, #tpu.memory_space<vmem>>, vector<1x32x16xf32>
      %89 = vector.shape_cast %88 : vector<1x32x16xf32> to vector<32x16xf32>
      %cst_64 = arith.constant dense<0.000000e+00> : vector<16x16xf32>
      %90 = tpu.matmul %65, %89, %cst_64 {dimension_numbers = #tpu.dot_dimension_numbers<[1], [0], [0], [1], [0, 0, 1, 1], [], []>} : vector<16x32xf32>, vector<32x16xf32>, vector<16x16xf32> -> vector<16x16xf32>
      %c1_65 = arith.constant 1 : index
      %c0_66 = arith.constant 0 : index
      %c0_67 = arith.constant 0 : index
      %91 = vector.load %arg6[%c1_65, %c0_66, %c0_67] : memref<2x1x16xf32, #tpu.memory_space<vmem>>, vector<1x1x16xf32>
      %92 = vector.shape_cast %91 : vector<1x1x16xf32> to vector<1x16xf32>
      %93 = vector.broadcast %92 : vector<1x16xf32> to vector<16x16xf32>
      %94 = arith.addf %90, %93 : vector<16x16xf32>
      %c1_68 = arith.constant 1 : index
      %c0_69 = arith.constant 0 : index
      %c0_70 = arith.constant 0 : index
      %95 = vector.load %arg7[%c1_68, %c0_69, %c0_70] : memref<2x32x16xf32, #tpu.memory_space<vmem>>, vector<1x32x16xf32>
      %96 = vector.shape_cast %95 : vector<1x32x16xf32> to vector<32x16xf32>
      %cst_71 = arith.constant dense<0.000000e+00> : vector<16x16xf32>
      %97 = tpu.matmul %65, %96, %cst_71 {dimension_numbers = #tpu.dot_dimension_numbers<[1], [0], [0], [1], [0, 0, 1, 1], [], []>} : vector<16x32xf32>, vector<32x16xf32>, vector<16x16xf32> -> vector<16x16xf32>
      %c1_72 = arith.constant 1 : index
      %c0_73 = arith.constant 0 : index
      %c0_74 = arith.constant 0 : index
      %98 = vector.load %arg8[%c1_72, %c0_73, %c0_74] : memref<2x1x16xf32, #tpu.memory_space<vmem>>, vector<1x1x16xf32>
      %99 = vector.shape_cast %98 : vector<1x1x16xf32> to vector<1x16xf32>
      %100 = vector.broadcast %99 : vector<1x16xf32> to vector<16x16xf32>
      %101 = arith.addf %97, %100 : vector<16x16xf32>
      %102 = arith.truncf %94 : vector<16x16xf32> to vector<16x16xbf16>
      %c1_75 = arith.constant 1 : index
      %c0_76 = arith.constant 0 : index
      %c0_77 = arith.constant 0 : index
      %103 = vector.load %arg10[%c1_75, %c0_76, %c0_77] : memref<2x16x16xbf16, #tpu.memory_space<vmem>>, vector<1x16x16xbf16>
      %104 = vector.shape_cast %103 : vector<1x16x16xbf16> to vector<16x16xbf16>
      %105 = vector.shape_cast %102 : vector<16x16xbf16> to vector<1x16x16xbf16>
      tpu.vector_store %arg10[%c1_75, %c0_76, %c0_77], %105 {strides = array<i32>} : memref<2x16x16xbf16, #tpu.memory_space<vmem>>, vector<1x16x16xbf16>,
      %106 = arith.truncf %101 : vector<16x16xf32> to vector<16x16xbf16>
      %c1_78 = arith.constant 1 : index
      %c0_79 = arith.constant 0 : index
      %c0_80 = arith.constant 0 : index
      %107 = vector.load %arg11[%c1_78, %c0_79, %c0_80] : memref<2x16x16xbf16, #tpu.memory_space<vmem>>, vector<1x16x16xbf16>
      %108 = vector.shape_cast %107 : vector<1x16x16xbf16> to vector<16x16xbf16>
      %109 = vector.shape_cast %106 : vector<16x16xbf16> to vector<1x16x16xbf16>
      tpu.vector_store %arg11[%c1_78, %c0_79, %c0_80], %109 {strides = array<i32>} : memref<2x16x16xbf16, #tpu.memory_space<vmem>>, vector<1x16x16xbf16>,
    } else {
    }
    %c8_i32 = arith.constant 8 : i32
    %3 = arith.muli %arg1, %c8_i32 : i32
    %4 = tpu.assume_multiple %3, 8 : i32
    %c0 = arith.constant 0 : index
    %5 = arith.index_cast %4 : i32 to index
    %c0_1 = arith.constant 0 : index
    %6 = vector.load %arg2[%c0, %5, %c0_1] : memref<1x16x32xf32, #tpu.memory_space<vmem>>, vector<1x8x32xf32>
    %7 = vector.shape_cast %6 : vector<1x8x32xf32> to vector<8x32xf32>
    %c0_2 = arith.constant 0 : index
    %c0_3 = arith.constant 0 : index
    %c0_4 = arith.constant 0 : index
    %8 = vector.load %arg3[%c0_2, %c0_3, %c0_4] : memref<2x32x16xf32, #tpu.memory_space<vmem>>, vector<1x32x16xf32>
    %9 = vector.shape_cast %8 : vector<1x32x16xf32> to vector<32x16xf32>
    %cst = arith.constant dense<0.000000e+00> : vector<8x16xf32>
    %10 = tpu.matmul %7, %9, %cst {dimension_numbers = #tpu.dot_dimension_numbers<[1], [0], [0], [1], [0, 0, 1, 1], [], []>} : vector<8x32xf32>, vector<32x16xf32>, vector<8x16xf32> -> vector<8x16xf32>
    %c0_5 = arith.constant 0 : index
    %c0_6 = arith.constant 0 : index
    %c0_7 = arith.constant 0 : index
    %11 = vector.load %arg4[%c0_5, %c0_6, %c0_7] : memref<2x1x16xf32, #tpu.memory_space<vmem>>, vector<1x1x16xf32>
    %12 = vector.shape_cast %11 : vector<1x1x16xf32> to vector<1x16xf32>
    %13 = vector.broadcast %12 : vector<1x16xf32> to vector<8x16xf32>
    %14 = arith.addf %10, %13 : vector<8x16xf32>
    %15 = arith.truncf %14 : vector<8x16xf32> to vector<8x16xbf16>
    %c0_8 = arith.constant 0 : index
    %c0_9 = arith.constant 0 : index
    %c0_10 = arith.constant 0 : index
    %16 = vector.load %arg10[%c0_8, %c0_9, %c0_10] : memref<2x16x16xbf16, #tpu.memory_space<vmem>>, vector<1x16x16xbf16>
    %17 = vector.shape_cast %16 : vector<1x16x16xbf16> to vector<16x16xbf16>
    %c0_11 = arith.constant 0 : index
    %c0_12 = arith.constant 0 : index
    %c0_13 = arith.constant 0 : index
    %18 = vector.load %arg11[%c0_11, %c0_12, %c0_13] : memref<2x16x16xbf16, #tpu.memory_space<vmem>>, vector<1x16x16xbf16>
    %19 = vector.shape_cast %18 : vector<1x16x16xbf16> to vector<16x16xbf16>
    %cst_14 = arith.constant dense<0.000000e+00> : vector<8x16xf32>
    %20 = tpu.matmul %15, %17, %cst_14 {dimension_numbers = #tpu.dot_dimension_numbers<[1], [1], [0], [0], [0, 0, 1, 0], [], []>} : vector<8x16xbf16>, vector<16x16xbf16>, vector<8x16xf32> -> vector<8x16xf32>
    %cst_15 = arith.constant dense<0xFF800000> : vector<8xf32>
    %21 = vector.multi_reduction <maximumf>, %20, %cst_15 [1] : vector<8x16xf32> to vector<8xf32>
    %22 = vector.shape_cast %21 : vector<8xf32> to vector<8x1xf32>
    %23 = vector.broadcast %22 : vector<8x1xf32> to vector<8x16xf32>
    %24 = arith.subf %20, %23 : vector<8x16xf32>
    %25 = math.exp %24 : vector<8x16xf32>
    %cst_16 = arith.constant dense<0.000000e+00> : vector<8xf32>
    %26 = vector.multi_reduction <add>, %25, %cst_16 [1] : vector<8x16xf32> to vector<8xf32>
    %27 = vector.shape_cast %26 : vector<8xf32> to vector<8x1xf32>
    %28 = tpu.reciprocal %27 {approx = true} : vector<8x1xf32> -> vector<8x1xf32>
    %29 = vector.broadcast %28 : vector<8x1xf32> to vector<8x16xf32>
    %30 = arith.mulf %25, %29 : vector<8x16xf32>
    %31 = arith.truncf %30 : vector<8x16xf32> to vector<8x16xbf16>
    %cst_17 = arith.constant dense<0.000000e+00> : vector<8x16xf32>
    %32 = tpu.matmul %31, %19, %cst_17 {dimension_numbers = #tpu.dot_dimension_numbers<[1], [0], [0], [1], [0, 0, 1, 1], [], []>} : vector<8x16xbf16>, vector<16x16xbf16>, vector<8x16xf32> -> vector<8x16xf32>
    %c1 = arith.constant 1 : index
    %c0_18 = arith.constant 0 : index
    %c0_19 = arith.constant 0 : index
    %33 = vector.load %arg3[%c1, %c0_18, %c0_19] : memref<2x32x16xf32, #tpu.memory_space<vmem>>, vector<1x32x16xf32>
    %34 = vector.shape_cast %33 : vector<1x32x16xf32> to vector<32x16xf32>
    %cst_20 = arith.constant dense<0.000000e+00> : vector<8x16xf32>
    %35 = tpu.matmul %7, %34, %cst_20 {dimension_numbers = #tpu.dot_dimension_numbers<[1], [0], [0], [1], [0, 0, 1, 1], [], []>} : vector<8x32xf32>, vector<32x16xf32>, vector<8x16xf32> -> vector<8x16xf32>
    %c1_21 = arith.constant 1 : index
    %c0_22 = arith.constant 0 : index
    %c0_23 = arith.constant 0 : index
    %36 = vector.load %arg4[%c1_21, %c0_22, %c0_23] : memref<2x1x16xf32, #tpu.memory_space<vmem>>, vector<1x1x16xf32>
    %37 = vector.shape_cast %36 : vector<1x1x16xf32> to vector<1x16xf32>
    %38 = vector.broadcast %37 : vector<1x16xf32> to vector<8x16xf32>
    %39 = arith.addf %35, %38 : vector<8x16xf32>
    %40 = arith.truncf %39 : vector<8x16xf32> to vector<8x16xbf16>
    %c1_24 = arith.constant 1 : index
    %c0_25 = arith.constant 0 : index
    %c0_26 = arith.constant 0 : index
    %41 = vector.load %arg10[%c1_24, %c0_25, %c0_26] : memref<2x16x16xbf16, #tpu.memory_space<vmem>>, vector<1x16x16xbf16>
    %42 = vector.shape_cast %41 : vector<1x16x16xbf16> to vector<16x16xbf16>
    %c1_27 = arith.constant 1 : index
    %c0_28 = arith.constant 0 : index
    %c0_29 = arith.constant 0 : index
    %43 = vector.load %arg11[%c1_27, %c0_28, %c0_29] : memref<2x16x16xbf16, #tpu.memory_space<vmem>>, vector<1x16x16xbf16>
    %44 = vector.shape_cast %43 : vector<1x16x16xbf16> to vector<16x16xbf16>
    %cst_30 = arith.constant dense<0.000000e+00> : vector<8x16xf32>
    %45 = tpu.matmul %40, %42, %cst_30 {dimension_numbers = #tpu.dot_dimension_numbers<[1], [1], [0], [0], [0, 0, 1, 0], [], []>} : vector<8x16xbf16>, vector<16x16xbf16>, vector<8x16xf32> -> vector<8x16xf32>
    %cst_31 = arith.constant dense<0xFF800000> : vector<8xf32>
    %46 = vector.multi_reduction <maximumf>, %45, %cst_31 [1] : vector<8x16xf32> to vector<8xf32>
    %47 = vector.shape_cast %46 : vector<8xf32> to vector<8x1xf32>
    %48 = vector.broadcast %47 : vector<8x1xf32> to vector<8x16xf32>
    %49 = arith.subf %45, %48 : vector<8x16xf32>
    %50 = math.exp %49 : vector<8x16xf32>
    %cst_32 = arith.constant dense<0.000000e+00> : vector<8xf32>
    %51 = vector.multi_reduction <add>, %50, %cst_32 [1] : vector<8x16xf32> to vector<8xf32>
    %52 = vector.shape_cast %51 : vector<8xf32> to vector<8x1xf32>
    %53 = tpu.reciprocal %52 {approx = true} : vector<8x1xf32> -> vector<8x1xf32>
    %54 = vector.broadcast %53 : vector<8x1xf32> to vector<8x16xf32>
    %55 = arith.mulf %50, %54 : vector<8x16xf32>
    %56 = arith.truncf %55 : vector<8x16xf32> to vector<8x16xbf16>
    %cst_33 = arith.constant dense<0.000000e+00> : vector<8x16xf32>
    %57 = tpu.matmul %56, %44, %cst_33 {dimension_numbers = #tpu.dot_dimension_numbers<[1], [0], [0], [1], [0, 0, 1, 1], [], []>} : vector<8x16xbf16>, vector<16x16xbf16>, vector<8x16xf32> -> vector<8x16xf32>
    %58 = tpu.concatenate %32, %57 in 1 : vector<8x16xf32>, vector<8x16xf32> -> vector<8x32xf32>
    %cst_34 = arith.constant 0.000000e+00 : f32
    %59 = vector.broadcast %cst_34 : f32 to vector<8x96xf32>
    %60 = tpu.concatenate %58, %59 in 1 : vector<8x32xf32>, vector<8x96xf32> -> vector<8x128xf32>
    %c0_35 = arith.constant 0 : index
    %c0_36 = arith.constant 0 : index
    %c0_37 = arith.constant 0 : index
    %61 = vector.load %arg9[%c0_35, %c0_36, %c0_37] : memref<1x8x128xf32, #tpu.memory_space<vmem>>, vector<1x8x128xf32>
    %62 = vector.shape_cast %61 : vector<1x8x128xf32> to vector<8x128xf32>
    %63 = vector.shape_cast %60 : vector<8x128xf32> to vector<1x8x128xf32>
    tpu.vector_store %arg9[%c0_35, %c0_36, %c0_37], %63 {strides = array<i32>} : memref<1x8x128xf32, #tpu.memory_space<vmem>>, vector<1x8x128xf32>,
    return
  }
  func.func @transform_0(%arg0: i32, %arg1: i32) -> (i32, i32, i32) {
    %c0_i32 = arith.constant 0 : i32
    %c0_i32_0 = arith.constant 0 : i32
    %c0_i32_1 = arith.constant 0 : i32
    return %arg0, %c0_i32, %c0_i32_0 : i32, i32, i32
  }
  func.func @transform_1(%arg0: i32, %arg1: i32) -> (i32, i32, i32) {
    %c0_i32 = arith.constant 0 : i32
    %c0_i32_0 = arith.constant 0 : i32
    %c0_i32_1 = arith.constant 0 : i32
    %c0_i32_2 = arith.constant 0 : i32
    return %c0_i32, %c0_i32_0, %c0_i32_1 : i32, i32, i32
  }
  func.func @transform_2(%arg0: i32, %arg1: i32) -> (i32, i32, i32) {
    %c0_i32 = arith.constant 0 : i32
    %c0_i32_0 = arith.constant 0 : i32
    %c0_i32_1 = arith.constant 0 : i32
    %c0_i32_2 = arith.constant 0 : i32
    return %c0_i32, %c0_i32_0, %c0_i32_1 : i32, i32, i32
  }
  func.func @transform_3(%arg0: i32, %arg1: i32) -> (i32, i32, i32) {
    %c0_i32 = arith.constant 0 : i32
    %c0_i32_0 = arith.constant 0 : i32
    %c0_i32_1 = arith.constant 0 : i32
    %c0_i32_2 = arith.constant 0 : i32
    return %c0_i32, %c0_i32_0, %c0_i32_1 : i32, i32, i32
  }
  func.func @transform_4(%arg0: i32, %arg1: i32) -> (i32, i32, i32) {
    %c0_i32 = arith.constant 0 : i32
    %c0_i32_0 = arith.constant 0 : i32
    %c0_i32_1 = arith.constant 0 : i32
    %c0_i32_2 = arith.constant 0 : i32
    return %c0_i32, %c0_i32_0, %c0_i32_1 : i32, i32, i32
  }
  func.func @transform_5(%arg0: i32, %arg1: i32) -> (i32, i32, i32) {
    %c0_i32 = arith.constant 0 : i32
    %c0_i32_0 = arith.constant 0 : i32
    %c0_i32_1 = arith.constant 0 : i32
    %c0_i32_2 = arith.constant 0 : i32
    return %c0_i32, %c0_i32_0, %c0_i32_1 : i32, i32, i32
  }
  func.func @transform_6(%arg0: i32, %arg1: i32) -> (i32, i32, i32) {
    %c0_i32 = arith.constant 0 : i32
    %c0_i32_0 = arith.constant 0 : i32
    %c0_i32_1 = arith.constant 0 : i32
    %c0_i32_2 = arith.constant 0 : i32
    return %c0_i32, %c0_i32_0, %c0_i32_1 : i32, i32, i32
  }
  func.func @transform_7(%arg0: i32, %arg1: i32) -> (i32, i32, i32) {
    %c0_i32 = arith.constant 0 : i32
    %c0_i32_0 = arith.constant 0 : i32
    return %arg0, %arg1, %c0_i32 : i32, i32, i32
  }
}

</mosaic_0001>

<llo_original>
// kernel: tpu_custom_call.1
$region0: #{tpu_custom_call.1}
  #allocation0 [shape = 'u32[]', space=smem, size = 0x4, offset = 0x4, fixed_abs, tag = 'smem constant byte address 0x4 - core index']
  #allocation1 [shape = 'u32[144,128]{1,0:T(1,128)}', space=vmem, size = 0x12000, scoped, tag = 'internal scratch']
  #allocation2 [shape = 'bf16[2,16,16]{2,1,0:T(16,128)(2,1)}', space=vmem, size = 0x2000, scoped, tag = 'scratch operand']
  #allocation3 [shape = 'bf16[2,16,16]{2,1,0:T(16,128)(2,1)}', space=vmem, size = 0x2000, scoped, tag = 'scratch operand']
  %s0 = inlined_call_operand.vmem [shape: f32[2,16,32], index: 0, kind: input, shape index: {}]
  %s1 = inlined_call_operand.vmem [shape: f32[2,32,16], index: 1, kind: input, shape index: {}]
  %s2 = inlined_call_operand.vmem [shape: f32[2,1,16], index: 2, kind: input, shape index: {}]
  %s3 = inlined_call_operand.vmem [shape: f32[2,32,16], index: 3, kind: input, shape index: {}]
  %s4 = inlined_call_operand.vmem [shape: f32[2,1,16], index: 4, kind: input, shape index: {}]
  %s5 = inlined_call_operand.vmem [shape: f32[2,32,16], index: 5, kind: input, shape index: {}]
  %s6 = inlined_call_operand.vmem [shape: f32[2,1,16], index: 6, kind: input, shape index: {}]
  %s7 = inlined_call_operand.hbm [shape: f32[2,16,128], index: 7, kind: output, shape index: {}]
  %s8 = sld [smem:[#allocation0]]
  $region65: #{tpu_custom_call.1} parent=0
    _
  %s10 = ssub.s32 1, %s8
  %s11 = scalar_select 0, %s10, %s8
  $region1: #{tpu_custom_call.1} parent=0
    #allocation4 [shape = 'u8[8192]{0}', space=vmem, size = 0x2000, scoped, tag = 'output window, operand 0']
    #allocation5 [shape = 's32[2]{0}', space=sflag, size = 0x8, scoped, tag = 'scoped memory for tpu_custom_call.1']
    %12 = vsyncpa [#allocation5], 0
    %s13 = scalar_lea.sflag [#allocation5], 1
    %14 = vsyncpa %s13, 0
    loop: start=0, step=1, limit=6
    $region2: #{tpu_custom_call.1} parent=1 // loop_pre_header
      _
    $region3: #{tpu_custom_call.1} parent=1 // loop_header
      %s16 = sphi 0, %s20
      %p17 = scmp.ge.s32.totalorder %s16, 6
      %s23 = sphi 0, %s35
      %s24 = sphi 0, %s31
      %s25 = sphi 0, %s23
      %s26 = sphi 0, %s24
      %s27 = sphi 0, %s25
      %s28 = sphi 0, %s26
      %s38 = sphi 0, %s40
      %s41 = sphi 0, %s38
      %s42 = sphi 0, %s41
      %s58 = sphi 0, %s42
      %s62 = sphi 0, %s62
      %s64 = sphi 0, %s62
      %s65 = sphi 0, %s64
      %s79 = sphi 0, %s65
      %s83 = sphi 0, %s83
      %s85 = sphi 0, %s83
      %s86 = sphi 0, %s85
      %s100 = sphi 0, %s86
      %s104 = sphi 0, %s104
      %s106 = sphi 0, %s104
      %s107 = sphi 0, %s106
      %s121 = sphi 0, %s107
      %s125 = sphi 0, %s125
      %s127 = sphi 0, %s125
      %s128 = sphi 0, %s127
      %s142 = sphi 0, %s128
      %s146 = sphi 0, %s146
      %s148 = sphi 0, %s146
      %s149 = sphi 0, %s148
      %s163 = sphi 0, %s149
      %s167 = sphi 0, %s167
      %s169 = sphi 0, %s167
      %s170 = sphi 0, %s169
      %s184 = sphi 0, %s170
      %s192 = sphi 0, %s194
      %s195 = sphi 0, %s192
      %s196 = sphi 0, %s195
      %s212 = sphi 0, %s196
    $region4: #{tpu_custom_call.1} parent=1 // loop_header_branch
      %19 = sbr.rel (%p17) target = $region8
    $region5: #{tpu_custom_call.1} parent=1 // loop_body
      %s21 = ssub.s32 %s16, 1
      %s22 = ssub.s32 %s16, 2
      %s29 = sadd.s32 1, %s24
      %p30 = scmp.ge.s32.totalorder %s29, 2
      %s31 = scalar_select %p30, 0, %s29
      %s32 = sadd.s32 1, %s23
      %s33 = scalar_select %p30, %s32, %s23
      %p34 = scmp.ge.s32.totalorder %s33, 2
      %s35 = scalar_select %p34, 0, %s33
      %s36 = ssub.s32 %s23, %s35
      %p37 = scmp.eq.s32.totalorder %s36, 0
      %s39 = sadd.s32 %s38, 1
      %s40 = scalar_select %p37, %s38, %s39
      %p43 = pneg %p37
      %p44 = scmp.eq.s32.totalorder %s16, 3
      %p45 = por %p43, %p44
      %p46 = scmp.ne.s32.totalorder %s38, %s41
      %p47 = scmp.eq.s32.totalorder %s16, 0
      %p48 = por %p46, %p47
      %p49 = scmp.ne.s32.totalorder %s38, %s41
      %p50 = scmp.eq.s32.totalorder %s21, 3
      %p51 = por %p49, %p50
      %p52 = scmp.ne.s32.totalorder %s41, %s42
      %p53 = scmp.eq.s32.totalorder %s21, 0
      %p54 = por %p52, %p53
      %p55 = scmp.ne.s32.totalorder %s41, %s42
      %p56 = scmp.eq.s32.totalorder %s22, 3
      %p57 = por %p55, %p56
      %p59 = scmp.ne.s32.totalorder %s42, %s58
      %p60 = scmp.eq.s32.totalorder %s22, 0
      %p61 = por %p59, %p60
      %s63 = sadd.s32 %s62, 1
      %p66 = scmp.eq.s32.totalorder %s16, 3
      %p67 = scmp.ne.s32.totalorder %s62, %s64
      %p68 = scmp.eq.s32.totalorder %s16, 0
      %p69 = por %p67, %p68
      %p70 = scmp.ne.s32.totalorder %s62, %s64
      %p71 = scmp.eq.s32.totalorder %s21, 3
      %p72 = por %p70, %p71
      %p73 = scmp.ne.s32.totalorder %s64, %s65
      %p74 = scmp.eq.s32.totalorder %s21, 0
      %p75 = por %p73, %p74
      %p76 = scmp.ne.s32.totalorder %s64, %s65
      %p77 = scmp.eq.s32.totalorder %s22, 3
      %p78 = por %p76, %p77
      %p80 = scmp.ne.s32.totalorder %s65, %s79
      %p81 = scmp.eq.s32.totalorder %s22, 0
      %p82 = por %p80, %p81
      %s84 = sadd.s32 %s83, 1
      %p87 = scmp.eq.s32.totalorder %s16, 3
      %p88 = scmp.ne.s32.totalorder %s83, %s85
      %p89 = scmp.eq.s32.totalorder %s16, 0
      %p90 = por %p88, %p89
      %p91 = scmp.ne.s32.totalorder %s83, %s85
      %p92 = scmp.eq.s32.totalorder %s21, 3
      %p93 = por %p91, %p92
      %p94 = scmp.ne.s32.totalorder %s85, %s86
      %p95 = scmp.eq.s32.totalorder %s21, 0
      %p96 = por %p94, %p95
      %p97 = scmp.ne.s32.totalorder %s85, %s86
      %p98 = scmp.eq.s32.totalorder %s22, 3
      %p99 = por %p97, %p98
      %p101 = scmp.ne.s32.totalorder %s86, %s100
      %p102 = scmp.eq.s32.totalorder %s22, 0
      %p103 = por %p101, %p102
      %s105 = sadd.s32 %s104, 1
      %p108 = scmp.eq.s32.totalorder %s16, 3
      %p109 = scmp.ne.s32.totalorder %s104, %s106
      %p110 = scmp.eq.s32.totalorder %s16, 0
      %p111 = por %p109, %p110
      %p112 = scmp.ne.s32.totalorder %s104, %s106
      %p113 = scmp.eq.s32.totalorder %s21, 3
      %p114 = por %p112, %p113
      %p115 = scmp.ne.s32.totalorder %s106, %s107
      %p116 = scmp.eq.s32.totalorder %s21, 0
      %p117 = por %p115, %p116
      %p118 = scmp.ne.s32.totalorder %s106, %s107
      %p119 = scmp.eq.s32.totalorder %s22, 3
      %p120 = por %p118, %p119
      %p122 = scmp.ne.s32.totalorder %s107, %s121
      %p123 = scmp.eq.s32.totalorder %s22, 0
      %p124 = por %p122, %p123
      %s126 = sadd.s32 %s125, 1
      %p129 = scmp.eq.s32.totalorder %s16, 3
      %p130 = scmp.ne.s32.totalorder %s125, %s127
      %p131 = scmp.eq.s32.totalorder %s16, 0
      %p132 = por %p130, %p131
      %p133 = scmp.ne.s32.totalorder %s125, %s127
      %p134 = scmp.eq.s32.totalorder %s21, 3
      %p135 = por %p133, %p134
      %p136 = scmp.ne.s32.totalorder %s127, %s128
      %p137 = scmp.eq.s32.totalorder %s21, 0
      %p138 = por %p136, %p137
      %p139 = scmp.ne.s32.totalorder %s127, %s128
      %p140 = scmp.eq.s32.totalorder %s22, 3
      %p141 = por %p139, %p140
      %p143 = scmp.ne.s32.totalorder %s128, %s142
      %p144 = scmp.eq.s32.totalorder %s22, 0
      %p145 = por %p143, %p144
      %s147 = sadd.s32 %s146, 1
      %p150 = scmp.eq.s32.totalorder %s16, 3
      %p151 = scmp.ne.s32.totalorder %s146, %s148
      %p152 = scmp.eq.s32.totalorder %s16, 0
      %p153 = por %p151, %p152
      %p154 = scmp.ne.s32.totalorder %s146, %s148
      %p155 = scmp.eq.s32.totalorder %s21, 3
      %p156 = por %p154, %p155
      %p157 = scmp.ne.s32.totalorder %s148, %s149
      %p158 = scmp.eq.s32.totalorder %s21, 0
      %p159 = por %p157, %p158
      %p160 = scmp.ne.s32.totalorder %s148, %s149
      %p161 = scmp.eq.s32.totalorder %s22, 3
      %p162 = por %p160, %p161
      %p164 = scmp.ne.s32.totalorder %s149, %s163
      %p165 = scmp.eq.s32.totalorder %s22, 0
      %p166 = por %p164, %p165
      %s168 = sadd.s32 %s167, 1
      %p171 = scmp.eq.s32.totalorder %s16, 3
      %p172 = scmp.ne.s32.totalorder %s167, %s169
      %p173 = scmp.eq.s32.totalorder %s16, 0
      %p174 = por %p172, %p173
      %p175 = scmp.ne.s32.totalorder %s167, %s169
      %p176 = scmp.eq.s32.totalorder %s21, 3
      %p177 = por %p175, %p176
      %p178 = scmp.ne.s32.totalorder %s169, %s170
      %p179 = scmp.eq.s32.totalorder %s21, 0
      %p180 = por %p178, %p179
      %p181 = scmp.ne.s32.totalorder %s169, %s170
      %p182 = scmp.eq.s32.totalorder %s22, 3
      %p183 = por %p181, %p182
      %p185 = scmp.ne.s32.totalorder %s170, %s184
      %p186 = scmp.eq.s32.totalorder %s22, 0
      %p187 = por %p185, %p186
      %s188 = ssub.s32 %s23, %s35
      %s189 = ssub.s32 %s24, %s31
      %s190 = sor.u32 %s188, %s189
      %p191 = scmp.eq.s32.totalorder %s190, 0
      %s193 = sadd.s32 %s192, 1
      %s194 = scalar_select %p191, %s192, %s193
      %p197 = pneg %p191
      %p198 = scmp.eq.s32.totalorder %s16, 3
      %p199 = por %p197, %p198
      %p200 = scmp.ne.s32.totalorder %s192, %s195
      %p201 = scmp.eq.s32.totalorder %s16, 0
      %p202 = por %p200, %p201
      %p203 = scmp.ne.s32.totalorder %s192, %s195
      %p204 = scmp.eq.s32.totalorder %s21, 3
      %p205 = por %p203, %p204
      %p206 = scmp.ne.s32.totalorder %s195, %s196
      %p207 = scmp.eq.s32.totalorder %s21, 0
      %p208 = por %p206, %p207
      %p209 = scmp.ne.s32.totalorder %s195, %s196
      %p210 = scmp.eq.s32.totalorder %s22, 3
      %p211 = por %p209, %p210
      %p213 = scmp.ne.s32.totalorder %s196, %s212
      %p214 = scmp.eq.s32.totalorder %s22, 0
      %p215 = por %p213, %p214
      %p216 = scmp.le.s32.totalorder 1, %s16
      %p217 = scmp.lt.s32.totalorder %s16, 5
      %p218 = pnand %p216, %p217
      %p219 = pneg %p218
      // Predicated region
      $region9: #{tpu_custom_call.1} parent=5 // pred_check
        _
      $region10: #{tpu_custom_call.1} parent=5 // pred_check_branch
        %221 = sbr.rel (%p218) target = $region12
      $region11: #{tpu_custom_call.1} parent=5 // pred_region
        %s222 = ssub.s32 %s16, 1
        // Predicated region
        $region13: #{tpu_custom_call.1} parent=11 // pred_check
          %p223 = pneg %p75
        $region14: #{tpu_custom_call.1} parent=11 // pred_check_branch
          %225 = sbr.rel (%p223) target = $region16
        $region15: #{tpu_custom_call.1} parent=11 // pred_region
          _
        $region16: #{tpu_custom_call.1} parent=11 // pred_fallthru
          _
        // Predicated region
        $region17: #{tpu_custom_call.1} parent=11 // pred_check
          %p226 = pneg %p96
        $region18: #{tpu_custom_call.1} parent=11 // pred_check_branch
          %228 = sbr.rel (%p226) target = $region20
        $region19: #{tpu_custom_call.1} parent=11 // pred_region
          _
        $region20: #{tpu_custom_call.1} parent=11 // pred_fallthru
          _
        // Predicated region
        $region21: #{tpu_custom_call.1} parent=11 // pred_check
          %p229 = pneg %p117
        $region22: #{tpu_custom_call.1} parent=11 // pred_check_branch
          %231 = sbr.rel (%p229) target = $region24
        $region23: #{tpu_custom_call.1} parent=11 // pred_region
          _
        $region24: #{tpu_custom_call.1} parent=11 // pred_fallthru
          _
        // Predicated region
        $region25: #{tpu_custom_call.1} parent=11 // pred_check
          %p232 = pneg %p138
        $region26: #{tpu_custom_call.1} parent=11 // pred_check_branch
          %234 = sbr.rel (%p232) target = $region28
        $region27: #{tpu_custom_call.1} parent=11 // pred_region
          _
        $region28: #{tpu_custom_call.1} parent=11 // pred_fallthru
          _
        // Predicated region
        $region29: #{tpu_custom_call.1} parent=11 // pred_check
          %p235 = pneg %p159
        $region30: #{tpu_custom_call.1} parent=11 // pred_check_branch
          %237 = sbr.rel (%p235) target = $region32
        $region31: #{tpu_custom_call.1} parent=11 // pred_region
          _
        $region32: #{tpu_custom_call.1} parent=11 // pred_fallthru
          _
        // Predicated region
        $region33: #{tpu_custom_call.1} parent=11 // pred_check
          %p238 = pneg %p180
        $region34: #{tpu_custom_call.1} parent=11 // pred_check_branch
          %240 = sbr.rel (%p238) target = $region36
        $region35: #{tpu_custom_call.1} parent=11 // pred_region
          _
        $region36: #{tpu_custom_call.1} parent=11 // pred_fallthru
          _
      $region12: #{tpu_custom_call.1} parent=5 // pred_fallthru
        _
      %p241 = scmp.lt.s32.totalorder %s16, 4
      // Predicated region
      $region37: #{tpu_custom_call.1} parent=5 // pred_check
        %p242 = pneg %p241
      $region38: #{tpu_custom_call.1} parent=5 // pred_check_branch
        %244 = sbr.rel (%p242) target = $region40
      $region39: #{tpu_custom_call.1} parent=5 // pred_region
        // Predicated region
        $region41: #{tpu_custom_call.1} parent=39 // pred_check
          %p245 = pneg %p48
        $region42: #{tpu_custom_call.1} parent=39 // pred_check_branch
          %247 = sbr.rel (%p245) target = $region44
        $region43: #{tpu_custom_call.1} parent=39 // pred_region
          %p248 = scmp.lt.s32.totalorder %s23, 1
          %s249 = scalar_select %p248, %s23, 1
          %s250 = smul.addr %s249, 2
          %s251 = smul.addr %s250, 8
          %s252 = scalar_lea.vmem %s0, %s251
        $region44: #{tpu_custom_call.1} parent=39 // pred_fallthru
          _
      $region40: #{tpu_custom_call.1} parent=5 // pred_fallthru
        _
      %p253 = scmp.le.s32.totalorder 1, %s16
      %p254 = scmp.lt.s32.totalorder %s16, 5
      %p255 = pnand %p253, %p254
      %p256 = pneg %p255
      // Predicated region
      $region45: #{tpu_custom_call.1} parent=5 // pred_check
        _
      $region46: #{tpu_custom_call.1} parent=5 // pred_check_branch
        %258 = sbr.rel (%p255) target = $region48
      $region47: #{tpu_custom_call.1} parent=5 // pred_region
        %s259 = ssub.s32 %s16, 1
        %p260 = scmp.lt.s32.totalorder %s25, 1
        %s261 = scalar_select %p260, %s25, 1
        %s262 = smul.addr %s261, 2
        %s263 = smul.addr %s262, 8
        %s264 = scalar_lea.vmem %s0, %s263
        %p265 = pneg %p54
        %p266 = pneg %p51
        %p267 = pneg %p75
        %p268 = pneg %p72
        %p269 = pneg %p96
        %p270 = pneg %p93
        %p271 = pneg %p117
        %p272 = pneg %p114
        %p273 = pneg %p138
        %p274 = pneg %p135
        %p275 = pneg %p159
        %p276 = pneg %p156
        %p277 = pneg %p180
        %p278 = pneg %p177
        %p279 = pneg %p208
        %p280 = pneg %p205
        %s281 = sand.u32 %s195, 1
        %s282 = scalar_lea.sflag [#allocation5], %s281
        %s283 = sand.u32 %s195, 1
        %s284 = smul.addr %s283, 8
        %s285 = scalar_lea.vmem [#allocation4], %s284
        %p286 = scmp.lt.s32.totalorder %s25, 1
        %s287 = scalar_select %p286, %s25, 1
        %s288 = smul.addr %s287, 2
        %s289 = smul.addr %s288, 8
        %s290 = scalar_lea.vmem %s0, %s289
        %p292 = scmp.eq.s32.totalorder %s26, 0
        // Predicated region
        $region49: #{tpu_custom_call.1} parent=47 // pred_check
          %p293 = pneg %p292
        $region50: #{tpu_custom_call.1} parent=47 // pred_check_branch
          %295 = sbr.rel (%p293) target = $region52
        $region51: #{tpu_custom_call.1} parent=47 // pred_region
          %v296 = vld [vmem:[%s290] sm:$0xff]
          %v297 = vld [vmem:[%s290 + $0x8] sm:$0xff]
          %v298 = vld [vmem:[%s3] sm:$0xff]
          %v299 = vld [vmem:[%s3 + $0x8] sm:$0xff]
          %v300 = vld [vmem:[%s3 + $0x10] sm:$0xff]
          %v301 = vld [vmem:[%s3 + $0x18] sm:$0xff]
          %v302 = vld [vmem:[%s4] sm:$0x1]
          %v304 = vlaneseq
          %v305 = vshrl.u32 %v304, 7
          %v306 = vsub.s32 0, %v305
          %v307 = vrot.slane %v302, %v306
          %vm309 = vcmask 261120
          %v311 = vsel %vm309, %v296, 0
          %v314 = vsel %vm309, %v297, 0
          %316 = vmatprep.subr.mxu0 0.0
          %317 = vmatpush1.msra.mxu0 %v298
          %318 = vmatprep.subr.mxu0 0.0
          %319 = vmatpush1.msra.mxu0 %v299
          %320 = vmatprep.subr.mxu0 0.0
          %321 = vmatpush1.msra.mxu0 %v300
          %322 = vmatprep.subr.mxu0 0.0
          %323 = vmatpush1.msra.mxu0 %v301
          %324 = vmatprep.subr.mxu0 0.0
          %325 = vmatpush1.msra.mxu0 0.0
          %326 = vmatprep.subr.mxu0 0.0
          %327 = vmatpush1.msra.mxu0 0.0
          %328 = vmatprep.subr.mxu0 0.0
          %329 = vmatpush1.msra.mxu0 0.0
          %330 = vmatprep.subr.mxu0 0.0
          %331 = vmatpush1.msra.mxu0 0.0
          %332 = vmatprep.subr.mxu0 0.0
          %333 = vmatpush1.msra.mxu0 0.0
          %334 = vmatprep.subr.mxu0 0.0
          %335 = vmatpush1.msra.mxu0 0.0
          %336 = vmatprep.subr.mxu0 0.0
          %337 = vmatpush1.msra.mxu0 0.0
          %338 = vmatprep.subr.mxu0 0.0
          %339 = vmatpush1.msra.mxu0 0.0
          %340 = vmatprep.subr.mxu0 0.0
          %341 = vmatpush1.msra.mxu0 0.0
          %342 = vmatprep.subr.mxu0 0.0
          %343 = vmatpush1.msra.mxu0 0.0
          %344 = vmatprep.subr.mxu0 0.0
          %345 = vmatpush1.msra.mxu0 0.0
          %346 = vmatprep.subr.mxu0 0.0
          %347 = vmatpush1.msra.mxu0 0.0
          %348 = vmatprep.subr.mxu0 0.0
          %349 = vmatpush1.msra.mxu0 0.0
          %350 = vmatprep.subr.mxu0 0.0
          %351 = vmatpush1.msra.mxu0 0.0
          %352 = vmatprep.subr.mxu0 0.0
          %353 = vmatpush1.msra.mxu0 0.0
          %354 = vmatprep.subr.mxu0 0.0
          %355 = vmatpush1.msra.mxu0 0.0
          %356 = vmatprep.subr.mxu0 0.0
          %357 = vmatpush1.msra.mxu0 0.0
          %358 = vmatprep.subr.mxu0 0.0
          %359 = vmatpush1.msra.mxu0 0.0
          %360 = vmatprep.subr.mxu0 0.0
          %361 = vmatpush1.msra.mxu0 0.0
          %362 = vmatprep.subr.mxu0 0.0
          %363 = vmatpush1.msra.mxu0 0.0
          %364 = vmatprep.subr.mxu0 0.0
          %365 = vmatpush1.msra.mxu0 0.0
          %366 = vmatprep.subr.mxu0 0.0
          %367 = vmatpush1.msra.mxu0 0.0
          %368 = vmatprep.subr.mxu0 0.0
          %369 = vmatpush1.msra.mxu0 0.0
          %370 = vmatprep.subr.mxu0 0.0
          %371 = vmatpush1.msra.mxu0 0.0
          %372 = vmatprep.subr.mxu0 0.0
          %373 = vmatpush1.msra.mxu0 0.0
          %374 = vmatprep.subr.mxu0 0.0
          %375 = vmatpush1.msra.mxu0 0.0
          %376 = vmatprep.subr.mxu0 0.0
          %377 = vmatpush1.msra.mxu0 0.0
          %378 = vmatprep.subr.mxu0 0.0
          %379 = vmatpush1.msra.mxu0 0.0
          %380 = vmatprep.mubr.f32.mxu0 0.0
          %381 = vmatmul.mubr.f32.gmra.mrb[0].mxu0 %v311
          %v382 = vpop.f32.mrb[0].mxu0
          %v383 = vadd.f32 %v307, %v382
          %v384 = vpop.f32.mrb[0].mxu0
          %385 = vmatprep.mubr.f32.mxu0 0.0
          %386 = vmatmul.mubr.f32.gmra.mrb[0].mxu0 %v314
          %v387 = vpop.f32.mrb[0].mxu0
          %v388 = vadd.f32 %v307, %v387
          %v389 = vpop.f32.mrb[0].mxu0
          %390 = vdwg.mxu0
          %v391 = vld [vmem:[%s5] sm:$0xff]
          %v392 = vld [vmem:[%s5 + $0x8] sm:$0xff]
          %v393 = vld [vmem:[%s5 + $0x10] sm:$0xff]
          %v394 = vld [vmem:[%s5 + $0x18] sm:$0xff]
          %v395 = vld [vmem:[%s6] sm:$0x1]
          %v397 = vlaneseq
          %v398 = vshrl.u32 %v397, 7
          %v399 = vsub.s32 0, %v398
          %v400 = vrot.slane %v395, %v399
          %402 = vmatprep.subr.mxu0 0.0
          %403 = vmatpush1.msra.mxu0 %v391
          %404 = vmatprep.subr.mxu0 0.0
          %405 = vmatpush1.msra.mxu0 %v392
          %406 = vmatprep.subr.mxu0 0.0
          %407 = vmatpush1.msra.mxu0 %v393
          %408 = vmatprep.subr.mxu0 0.0
          %409 = vmatpush1.msra.mxu0 %v394
          %410 = vmatprep.subr.mxu0 0.0
          %411 = vmatpush1.msra.mxu0 0.0
          %412 = vmatprep.subr.mxu0 0.0
          %413 = vmatpush1.msra.mxu0 0.0
          %414 = vmatprep.subr.mxu0 0.0
          %415 = vmatpush1.msra.mxu0 0.0
          %416 = vmatprep.subr.mxu0 0.0
          %417 = vmatpush1.msra.mxu0 0.0
          %418 = vmatprep.subr.mxu0 0.0
          %419 = vmatpush1.msra.mxu0 0.0
          %420 = vmatprep.subr.mxu0 0.0
          %421 = vmatpush1.msra.mxu0 0.0
          %422 = vmatprep.subr.mxu0 0.0
          %423 = vmatpush1.msra.mxu0 0.0
          %424 = vmatprep.subr.mxu0 0.0
          %425 = vmatpush1.msra.mxu0 0.0
          %426 = vmatprep.subr.mxu0 0.0
          %427 = vmatpush1.msra.mxu0 0.0
          %428 = vmatprep.subr.mxu0 0.0
          %429 = vmatpush1.msra.mxu0 0.0
          %430 = vmatprep.subr.mxu0 0.0
          %431 = vmatpush1.msra.mxu0 0.0
          %432 = vmatprep.subr.mxu0 0.0
          %433 = vmatpush1.msra.mxu0 0.0
          %434 = vmatprep.subr.mxu0 0.0
          %435 = vmatpush1.msra.mxu0 0.0
          %436 = vmatprep.subr.mxu0 0.0
          %437 = vmatpush1.msra.mxu0 0.0
          %438 = vmatprep.subr.mxu0 0.0
          %439 = vmatpush1.msra.mxu0 0.0
          %440 = vmatprep.subr.mxu0 0.0
          %441 = vmatpush1.msra.mxu0 0.0
          %442 = vmatprep.subr.mxu0 0.0
          %443 = vmatpush1.msra.mxu0 0.0
          %444 = vmatprep.subr.mxu0 0.0
          %445 = vmatpush1.msra.mxu0 0.0
          %446 = vmatprep.subr.mxu0 0.0
          %447 = vmatpush1.msra.mxu0 0.0
          %448 = vmatprep.subr.mxu0 0.0
          %449 = vmatpush1.msra.mxu0 0.0
          %450 = vmatprep.subr.mxu0 0.0
          %451 = vmatpush1.msra.mxu0 0.0
          %452 = vmatprep.subr.mxu0 0.0
          %453 = vmatpush1.msra.mxu0 0.0
          %454 = vmatprep.subr.mxu0 0.0
          %455 = vmatpush1.msra.mxu0 0.0
          %456 = vmatprep.subr.mxu0 0.0
          %457 = vmatpush1.msra.mxu0 0.0
          %458 = vmatprep.subr.mxu0 0.0
          %459 = vmatpush1.msra.mxu0 0.0
          %460 = vmatprep.subr.mxu0 0.0
          %461 = vmatpush1.msra.mxu0 0.0
          %462 = vmatprep.subr.mxu0 0.0
          %463 = vmatpush1.msra.mxu0 0.0
          %464 = vmatprep.subr.mxu0 0.0
          %465 = vmatpush1.msra.mxu0 0.0
          %466 = vmatprep.mubr.f32.mxu0 0.0
          %467 = vmatmul.mubr.f32.gmra.mrb[0].mxu0 %v311
          %v468 = vpop.f32.mrb[0].mxu0
          %v469 = vadd.f32 %v400, %v468
          %v470 = vpop.f32.mrb[0].mxu0
          %471 = vmatprep.mubr.f32.mxu0 0.0
          %472 = vmatmul.mubr.f32.gmra.mrb[0].mxu0 %v314
          %v473 = vpop.f32.mrb[0].mxu0
          %v474 = vadd.f32 %v400, %v473
          %v475 = vpop.f32.mrb[0].mxu0
          %476 = vdwg.mxu0
          %v477 = vpack.c.bf16 %v388, %v383
          %vm478 = vcmask 130048
          %479 = vst.msk [vmem:[#allocation2] sm:$0xff] %vm478, %v477
          %v480 = vpack.c.bf16 %v474, %v469
          %481 = vst.msk [vmem:[#allocation3] sm:$0xff] %vm478, %v480
          %s482 = scalar_lea.vmem %s3, 32
          %v483 = vld [vmem:[%s482] sm:$0xff]
          %v484 = vld [vmem:[%s482 + $0x8] sm:$0xff]
          %v485 = vld [vmem:[%s482 + $0x10] sm:$0xff]
          %v486 = vld [vmem:[%s482 + $0x18] sm:$0xff]
          %s487 = scalar_lea.vmem %s4, 1
          %v488 = vld [vmem:[%s487] sm:$0x1]
          %v490 = vlaneseq
          %v491 = vshrl.u32 %v490, 7
          %v492 = vsub.s32 0, %v491
          %v493 = vrot.slane %v488, %v492
          %495 = vmatprep.subr.mxu0 0.0
          %496 = vmatpush1.msra.mxu0 %v483
          %497 = vmatprep.subr.mxu0 0.0
          %498 = vmatpush1.msra.mxu0 %v484
          %499 = vmatprep.subr.mxu0 0.0
          %500 = vmatpush1.msra.mxu0 %v485
          %501 = vmatprep.subr.mxu0 0.0
          %502 = vmatpush1.msra.mxu0 %v486
          %503 = vmatprep.subr.mxu0 0.0
          %504 = vmatpush1.msra.mxu0 0.0
          %505 = vmatprep.subr.mxu0 0.0
          %506 = vmatpush1.msra.mxu0 0.0
          %507 = vmatprep.subr.mxu0 0.0
          %508 = vmatpush1.msra.mxu0 0.0
          %509 = vmatprep.subr.mxu0 0.0
          %510 = vmatpush1.msra.mxu0 0.0
          %511 = vmatprep.subr.mxu0 0.0
          %512 = vmatpush1.msra.mxu0 0.0
          %513 = vmatprep.subr.mxu0 0.0
          %514 = vmatpush1.msra.mxu0 0.0
          %515 = vmatprep.subr.mxu0 0.0
          %516 = vmatpush1.msra.mxu0 0.0
          %517 = vmatprep.subr.mxu0 0.0
          %518 = vmatpush1.msra.mxu0 0.0
          %519 = vmatprep.subr.mxu0 0.0
          %520 = vmatpush1.msra.mxu0 0.0
          %521 = vmatprep.subr.mxu0 0.0
          %522 = vmatpush1.msra.mxu0 0.0
          %523 = vmatprep.subr.mxu0 0.0
          %524 = vmatpush1.msra.mxu0 0.0
          %525 = vmatprep.subr.mxu0 0.0
          %526 = vmatpush1.msra.mxu0 0.0
          %527 = vmatprep.subr.mxu0 0.0
          %528 = vmatpush1.msra.mxu0 0.0
          %529 = vmatprep.subr.mxu0 0.0
          %530 = vmatpush1.msra.mxu0 0.0
          %531 = vmatprep.subr.mxu0 0.0
          %532 = vmatpush1.msra.mxu0 0.0
          %533 = vmatprep.subr.mxu0 0.0
          %534 = vmatpush1.msra.mxu0 0.0
          %535 = vmatprep.subr.mxu0 0.0
          %536 = vmatpush1.msra.mxu0 0.0
          %537 = vmatprep.subr.mxu0 0.0
          %538 = vmatpush1.msra.mxu0 0.0
          %539 = vmatprep.subr.mxu0 0.0
          %540 = vmatpush1.msra.mxu0 0.0
          %541 = vmatprep.subr.mxu0 0.0
          %542 = vmatpush1.msra.mxu0 0.0
          %543 = vmatprep.subr.mxu0 0.0
          %544 = vmatpush1.msra.mxu0 0.0
          %545 = vmatprep.subr.mxu0 0.0
          %546 = vmatpush1.msra.mxu0 0.0
          %547 = vmatprep.subr.mxu0 0.0
          %548 = vmatpush1.msra.mxu0 0.0
          %549 = vmatprep.subr.mxu0 0.0
          %550 = vmatpush1.msra.mxu0 0.0
          %551 = vmatprep.subr.mxu0 0.0
          %552 = vmatpush1.msra.mxu0 0.0
          %553 = vmatprep.subr.mxu0 0.0
          %554 = vmatpush1.msra.mxu0 0.0
          %555 = vmatprep.subr.mxu0 0.0
          %556 = vmatpush1.msra.mxu0 0.0
          %557 = vmatprep.subr.mxu0 0.0
          %558 = vmatpush1.msra.mxu0 0.0
          %559 = vmatprep.mubr.f32.mxu0 0.0
          %560 = vmatmul.mubr.f32.gmra.mrb[0].mxu0 %v311
          %v561 = vpop.f32.mrb[0].mxu0
          %v562 = vadd.f32 %v493, %v561
          %v563 = vpop.f32.mrb[0].mxu0
          %564 = vmatprep.mubr.f32.mxu0 0.0
          %565 = vmatmul.mubr.f32.gmra.mrb[0].mxu0 %v314
          %v566 = vpop.f32.mrb[0].mxu0
          %v567 = vadd.f32 %v493, %v566
          %v568 = vpop.f32.mrb[0].mxu0
          %569 = vdwg.mxu0
          %s570 = scalar_lea.vmem %s5, 32
          %v571 = vld [vmem:[%s570] sm:$0xff]
          %v572 = vld [vmem:[%s570 + $0x8] sm:$0xff]
          %v573 = vld [vmem:[%s570 + $0x10] sm:$0xff]
          %v574 = vld [vmem:[%s570 + $0x18] sm:$0xff]
          %s575 = scalar_lea.vmem %s6, 1
          %v576 = vld [vmem:[%s575] sm:$0x1]
          %v578 = vlaneseq
          %v579 = vshrl.u32 %v578, 7
          %v580 = vsub.s32 0, %v579
          %v581 = vrot.slane %v576, %v580
          %583 = vmatprep.subr.mxu0 0.0
          %584 = vmatpush1.msra.mxu0 %v571
          %585 = vmatprep.subr.mxu0 0.0
          %586 = vmatpush1.msra.mxu0 %v572
          %587 = vmatprep.subr.mxu0 0.0
          %588 = vmatpush1.msra.mxu0 %v573
          %589 = vmatprep.subr.mxu0 0.0
          %590 = vmatpush1.msra.mxu0 %v574
          %591 = vmatprep.subr.mxu0 0.0
          %592 = vmatpush1.msra.mxu0 0.0
          %593 = vmatprep.subr.mxu0 0.0
          %594 = vmatpush1.msra.mxu0 0.0
          %595 = vmatprep.subr.mxu0 0.0
          %596 = vmatpush1.msra.mxu0 0.0
          %597 = vmatprep.subr.mxu0 0.0
          %598 = vmatpush1.msra.mxu0 0.0
          %599 = vmatprep.subr.mxu0 0.0
          %600 = vmatpush1.msra.mxu0 0.0
          %601 = vmatprep.subr.mxu0 0.0
          %602 = vmatpush1.msra.mxu0 0.0
          %603 = vmatprep.subr.mxu0 0.0
          %604 = vmatpush1.msra.mxu0 0.0
          %605 = vmatprep.subr.mxu0 0.0
          %606 = vmatpush1.msra.mxu0 0.0
          %607 = vmatprep.subr.mxu0 0.0
          %608 = vmatpush1.msra.mxu0 0.0
          %609 = vmatprep.subr.mxu0 0.0
          %610 = vmatpush1.msra.mxu0 0.0
          %611 = vmatprep.subr.mxu0 0.0
          %612 = vmatpush1.msra.mxu0 0.0
          %613 = vmatprep.subr.mxu0 0.0
          %614 = vmatpush1.msra.mxu0 0.0
          %615 = vmatprep.subr.mxu0 0.0
          %616 = vmatpush1.msra.mxu0 0.0
          %617 = vmatprep.subr.mxu0 0.0
          %618 = vmatpush1.msra.mxu0 0.0
          %619 = vmatprep.subr.mxu0 0.0
          %620 = vmatpush1.msra.mxu0 0.0
          %621 = vmatprep.subr.mxu0 0.0
          %622 = vmatpush1.msra.mxu0 0.0
          %623 = vmatprep.subr.mxu0 0.0
          %624 = vmatpush1.msra.mxu0 0.0
          %625 = vmatprep.subr.mxu0 0.0
          %626 = vmatpush1.msra.mxu0 0.0
          %627 = vmatprep.subr.mxu0 0.0
          %628 = vmatpush1.msra.mxu0 0.0
          %629 = vmatprep.subr.mxu0 0.0
          %630 = vmatpush1.msra.mxu0 0.0
          %631 = vmatprep.subr.mxu0 0.0
          %632 = vmatpush1.msra.mxu0 0.0
          %633 = vmatprep.subr.mxu0 0.0
          %634 = vmatpush1.msra.mxu0 0.0
          %635 = vmatprep.subr.mxu0 0.0
          %636 = vmatpush1.msra.mxu0 0.0
          %637 = vmatprep.subr.mxu0 0.0
          %638 = vmatpush1.msra.mxu0 0.0
          %639 = vmatprep.subr.mxu0 0.0
          %640 = vmatpush1.msra.mxu0 0.0
          %641 = vmatprep.subr.mxu0 0.0
          %642 = vmatpush1.msra.mxu0 0.0
          %643 = vmatprep.subr.mxu0 0.0
          %644 = vmatpush1.msra.mxu0 0.0
          %645 = vmatprep.subr.mxu0 0.0
          %646 = vmatpush1.msra.mxu0 0.0
          %647 = vmatprep.mubr.f32.mxu0 0.0
          %648 = vmatmul.mubr.f32.gmra.mrb[0].mxu0 %v311
          %v649 = vpop.f32.mrb[0].mxu0
          %v650 = vadd.f32 %v581, %v649
          %v651 = vpop.f32.mrb[0].mxu0
          %652 = vmatprep.mubr.f32.mxu0 0.0
          %653 = vmatmul.mubr.f32.gmra.mrb[0].mxu0 %v314
          %v654 = vpop.f32.mrb[0].mxu0
          %v655 = vadd.f32 %v581, %v654
          %v656 = vpop.f32.mrb[0].mxu0
          %657 = vdwg.mxu0
          %v658 = vpack.c.bf16 %v567, %v562
          %s659 = scalar_lea.vmem [#allocation2], 8
          %660 = vst.msk [vmem:[%s659] sm:$0xff] %vm478, %v658
          %v661 = vpack.c.bf16 %v655, %v650
          %s662 = scalar_lea.vmem [#allocation3], 8
          %663 = vst.msk [vmem:[%s662] sm:$0xff] %vm478, %v661
        $region52: #{tpu_custom_call.1} parent=47 // pred_fallthru
          _
        %s664 = smul.u32 %s26, 8
        %s665 = scalar_lea.vmem %s290, %s664
        %v666 = vld [vmem:[%s665] sm:$0xff]
        %v667 = vld [vmem:[%s1] sm:$0xff]
        %v668 = vld [vmem:[%s1 + $0x8] sm:$0xff]
        %v669 = vld [vmem:[%s1 + $0x10] sm:$0xff]
        %v670 = vld [vmem:[%s1 + $0x18] sm:$0xff]
        %v671 = vld [vmem:[%s2] sm:$0x1]
        %v673 = vlaneseq
        %v674 = vshrl.u32 %v673, 7
        %v675 = vsub.s32 0, %v674
        %v676 = vrot.slane %v671, %v675
        %vm678 = vcmask 261120
        %v680 = vsel %vm678, %v666, 0
        %682 = vmatprep.subr.mxu0 0.0
        %683 = vmatpush1.msra.mxu0 %v667
        %684 = vmatprep.subr.mxu0 0.0
        %685 = vmatpush1.msra.mxu0 %v668
        %686 = vmatprep.subr.mxu0 0.0
        %687 = vmatpush1.msra.mxu0 %v669
        %688 = vmatprep.subr.mxu0 0.0
        %689 = vmatpush1.msra.mxu0 %v670
        %690 = vmatprep.subr.mxu0 0.0
        %691 = vmatpush1.msra.mxu0 0.0
        %692 = vmatprep.subr.mxu0 0.0
        %693 = vmatpush1.msra.mxu0 0.0
        %694 = vmatprep.subr.mxu0 0.0
        %695 = vmatpush1.msra.mxu0 0.0
        %696 = vmatprep.subr.mxu0 0.0
        %697 = vmatpush1.msra.mxu0 0.0
        %698 = vmatprep.subr.mxu0 0.0
        %699 = vmatpush1.msra.mxu0 0.0
        %700 = vmatprep.subr.mxu0 0.0
        %701 = vmatpush1.msra.mxu0 0.0
        %702 = vmatprep.subr.mxu0 0.0
        %703 = vmatpush1.msra.mxu0 0.0
        %704 = vmatprep.subr.mxu0 0.0
        %705 = vmatpush1.msra.mxu0 0.0
        %706 = vmatprep.subr.mxu0 0.0
        %707 = vmatpush1.msra.mxu0 0.0
        %708 = vmatprep.subr.mxu0 0.0
        %709 = vmatpush1.msra.mxu0 0.0
        %710 = vmatprep.subr.mxu0 0.0
        %711 = vmatpush1.msra.mxu0 0.0
        %712 = vmatprep.subr.mxu0 0.0
        %713 = vmatpush1.msra.mxu0 0.0
        %714 = vmatprep.subr.mxu0 0.0
        %715 = vmatpush1.msra.mxu0 0.0
        %716 = vmatprep.subr.mxu0 0.0
        %717 = vmatpush1.msra.mxu0 0.0
        %718 = vmatprep.subr.mxu0 0.0
        %719 = vmatpush1.msra.mxu0 0.0
        %720 = vmatprep.subr.mxu0 0.0
        %721 = vmatpush1.msra.mxu0 0.0
        %722 = vmatprep.subr.mxu0 0.0
        %723 = vmatpush1.msra.mxu0 0.0
        %724 = vmatprep.subr.mxu0 0.0
        %725 = vmatpush1.msra.mxu0 0.0
        %726 = vmatprep.subr.mxu0 0.0
        %727 = vmatpush1.msra.mxu0 0.0
        %728 = vmatprep.subr.mxu0 0.0
        %729 = vmatpush1.msra.mxu0 0.0
        %730 = vmatprep.subr.mxu0 0.0
        %731 = vmatpush1.msra.mxu0 0.0
        %732 = vmatprep.subr.mxu0 0.0
        %733 = vmatpush1.msra.mxu0 0.0
        %734 = vmatprep.subr.mxu0 0.0
        %735 = vmatpush1.msra.mxu0 0.0
        %736 = vmatprep.subr.mxu0 0.0
        %737 = vmatpush1.msra.mxu0 0.0
        %738 = vmatprep.subr.mxu0 0.0
        %739 = vmatpush1.msra.mxu0 0.0
        %740 = vmatprep.subr.mxu0 0.0
        %741 = vmatpush1.msra.mxu0 0.0
        %742 = vmatprep.subr.mxu0 0.0
        %743 = vmatpush1.msra.mxu0 0.0
        %744 = vmatprep.subr.mxu0 0.0
        %745 = vmatpush1.msra.mxu0 0.0
        %746 = vmatprep.mubr.f32.mxu0 0.0
        %747 = vmatmul.mubr.f32.gmra.mrb[0].mxu0 %v680
        %v748 = vpop.f32.mrb[0].mxu0
        %v749 = vadd.f32 %v676, %v748
        %v750 = vpop.f32.mrb[0].mxu0
        %751 = vdwg.mxu0
        %v752 = vpack.c.bf16 %v749, %v749
        %v753 = vld [vmem:[#allocation2] sm:$0xff]
        %v754 = vld [vmem:[#allocation3] sm:$0xff]
        %vm755 = vcmask 130048
        %v757 = vsel %vm755, %v752, 0
        %v760 = vsel %vm755, %v753, 0
        %762 = vmatprep.subr.bf16.mxu0 0
        %763 = vmatpush1.bf16.xpose.msra.mxu0 %v760
        %764 = vmatprep.subr.bf16.mxu0 0
        %765 = vmatpush1.bf16.xpose.msra.mxu0 0
        %766 = vmatprep.subr.bf16.mxu0 0
        %767 = vmatpush1.bf16.xpose.msra.mxu0 0
        %768 = vmatprep.subr.bf16.mxu0 0
        %769 = vmatpush1.bf16.xpose.msra.mxu0 0
        %770 = vmatprep.subr.bf16.mxu0 0
        %771 = vmatpush1.bf16.xpose.msra.mxu0 0
        %772 = vmatprep.subr.bf16.mxu0 0
        %773 = vmatpush1.bf16.xpose.msra.mxu0 0
        %774 = vmatprep.subr.bf16.mxu0 0
        %775 = vmatpush1.bf16.xpose.msra.mxu0 0
        %776 = vmatprep.subr.bf16.mxu0 0
        %777 = vmatpush1.bf16.xpose.msra.mxu0 0
        %778 = vmatprep.subr.bf16.mxu0 0
        %779 = vmatpush1.bf16.xpose.msra.mxu0 0
        %780 = vmatprep.subr.bf16.mxu0 0
        %781 = vmatpush1.bf16.xpose.msra.mxu0 0
        %782 = vmatprep.subr.bf16.mxu0 0
        %783 = vmatpush1.bf16.xpose.msra.mxu0 0
        %784 = vmatprep.subr.bf16.mxu0 0
        %785 = vmatpush1.bf16.xpose.msra.mxu0 0
        %786 = vmatprep.subr.bf16.mxu0 0
        %787 = vmatpush1.bf16.xpose.msra.mxu0 0
        %788 = vmatprep.subr.bf16.mxu0 0
        %789 = vmatpush1.bf16.xpose.msra.mxu0 0
        %790 = vmatprep.subr.bf16.mxu0 0
        %791 = vmatpush1.bf16.xpose.msra.mxu0 0
        %792 = vmatprep.subr.bf16.mxu0 0
        %793 = vmatpush1.bf16.xpose.msra.mxu0 0
        %794 = vmatprep.mubr.bf16.mxu0 0
        %795 = vmatmul.mubr.bf16.gmra.mrb[0].mxu0 %v757
        %v796 = vpop.f32.mrb[0].mxu0
        %v797 = vadd.f32 0.0, %v796
        %v798 = vpop.f32.mrb[0].mxu0
        %v799 = vpop.f32.mrb[0].mxu0
        %v800 = vpop.f32.mrb[0].mxu0
        %801 = vdwg.mxu0
        %v802 = vsel %vm755, %v797, -inf
        %803 = vmax.xlane.f32.xlu0 %v802
        %v804 = vpop.xlane.xlu0 %803
        %v805 = vsub.f32 %v797, %v804
        %v806 = vmul.f32 %v805, 1.442695
        %v807 = vpow.pop %v806
        %v808 = vsel %vm755, %v807, 0.0
        %809 = vadd.xlane.f32.xlu0 %v808
        %v810 = vpop.xlane.xlu0 %809
        %v811 = vrcp.pop %v810
        %v812 = vmul.f32 %v807, %v811
        %v813 = vpack.c.bf16 %v812, %v812
        %v815 = vsel %vm755, %v813, 0
        %817 = vmatprep.subr.bf16.mxu0 0
        %818 = vmatpush1.bf16.msra.mxu0 %v754
        %819 = vmatprep.subr.bf16.mxu0 0
        %820 = vmatpush1.bf16.msra.mxu0 0
        %821 = vmatprep.subr.bf16.mxu0 0
        %822 = vmatpush1.bf16.msra.mxu0 0
        %823 = vmatprep.subr.bf16.mxu0 0
        %824 = vmatpush1.bf16.msra.mxu0 0
        %825 = vmatprep.subr.bf16.mxu0 0
        %826 = vmatpush1.bf16.msra.mxu0 0
        %827 = vmatprep.subr.bf16.mxu0 0
        %828 = vmatpush1.bf16.msra.mxu0 0
        %829 = vmatprep.subr.bf16.mxu0 0
        %830 = vmatpush1.bf16.msra.mxu0 0
        %831 = vmatprep.subr.bf16.mxu0 0
        %832 = vmatpush1.bf16.msra.mxu0 0
        %833 = vmatprep.subr.bf16.mxu0 0
        %834 = vmatpush1.bf16.msra.mxu0 0
        %835 = vmatprep.subr.bf16.mxu0 0
        %836 = vmatpush1.bf16.msra.mxu0 0
        %837 = vmatprep.subr.bf16.mxu0 0
        %838 = vmatpush1.bf16.msra.mxu0 0
        %839 = vmatprep.subr.bf16.mxu0 0
        %840 = vmatpush1.bf16.msra.mxu0 0
        %841 = vmatprep.subr.bf16.mxu0 0
        %842 = vmatpush1.bf16.msra.mxu0 0
        %843 = vmatprep.subr.bf16.mxu0 0
        %844 = vmatpush1.bf16.msra.mxu0 0
        %845 = vmatprep.subr.bf16.mxu0 0
        %846 = vmatpush1.bf16.msra.mxu0 0
        %847 = vmatprep.subr.bf16.mxu0 0
        %848 = vmatpush1.bf16.msra.mxu0 0
        %849 = vmatprep.mubr.bf16.mxu0 0
        %850 = vmatmul.mubr.bf16.gmra.mrb[0].mxu0 %v815
        %v851 = vpop.f32.mrb[0].mxu0
        %v852 = vadd.f32 0.0, %v851
        %v853 = vpop.f32.mrb[0].mxu0
        %v854 = vpop.f32.mrb[0].mxu0
        %v855 = vpop.f32.mrb[0].mxu0
        %856 = vdwg.mxu0
        %s857 = scalar_lea.vmem %s1, 32
        %v858 = vld [vmem:[%s857] sm:$0xff]
        %v859 = vld [vmem:[%s857 + $0x8] sm:$0xff]
        %v860 = vld [vmem:[%s857 + $0x10] sm:$0xff]
        %v861 = vld [vmem:[%s857 + $0x18] sm:$0xff]
        %s862 = scalar_lea.vmem %s2, 1
        %v863 = vld [vmem:[%s862] sm:$0x1]
        %v865 = vlaneseq
        %v866 = vshrl.u32 %v865, 7
        %v867 = vsub.s32 0, %v866
        %v868 = vrot.slane %v863, %v867
        %870 = vmatprep.subr.mxu0 0.0
        %871 = vmatpush1.msra.mxu0 %v858
        %872 = vmatprep.subr.mxu0 0.0
        %873 = vmatpush1.msra.mxu0 %v859
        %874 = vmatprep.subr.mxu0 0.0
        %875 = vmatpush1.msra.mxu0 %v860
        %876 = vmatprep.subr.mxu0 0.0
        %877 = vmatpush1.msra.mxu0 %v861
        %878 = vmatprep.subr.mxu0 0.0
        %879 = vmatpush1.msra.mxu0 0.0
        %880 = vmatprep.subr.mxu0 0.0
        %881 = vmatpush1.msra.mxu0 0.0
        %882 = vmatprep.subr.mxu0 0.0
        %883 = vmatpush1.msra.mxu0 0.0
        %884 = vmatprep.subr.mxu0 0.0
        %885 = vmatpush1.msra.mxu0 0.0
        %886 = vmatprep.subr.mxu0 0.0
        %887 = vmatpush1.msra.mxu0 0.0
        %888 = vmatprep.subr.mxu0 0.0
        %889 = vmatpush1.msra.mxu0 0.0
        %890 = vmatprep.subr.mxu0 0.0
        %891 = vmatpush1.msra.mxu0 0.0
        %892 = vmatprep.subr.mxu0 0.0
        %893 = vmatpush1.msra.mxu0 0.0
        %894 = vmatprep.subr.mxu0 0.0
        %895 = vmatpush1.msra.mxu0 0.0
        %896 = vmatprep.subr.mxu0 0.0
        %897 = vmatpush1.msra.mxu0 0.0
        %898 = vmatprep.subr.mxu0 0.0
        %899 = vmatpush1.msra.mxu0 0.0
        %900 = vmatprep.subr.mxu0 0.0
        %901 = vmatpush1.msra.mxu0 0.0
        %902 = vmatprep.subr.mxu0 0.0
        %903 = vmatpush1.msra.mxu0 0.0
        %904 = vmatprep.subr.mxu0 0.0
        %905 = vmatpush1.msra.mxu0 0.0
        %906 = vmatprep.subr.mxu0 0.0
        %907 = vmatpush1.msra.mxu0 0.0
        %908 = vmatprep.subr.mxu0 0.0
        %909 = vmatpush1.msra.mxu0 0.0
        %910 = vmatprep.subr.mxu0 0.0
        %911 = vmatpush1.msra.mxu0 0.0
        %912 = vmatprep.subr.mxu0 0.0
        %913 = vmatpush1.msra.mxu0 0.0
        %914 = vmatprep.subr.mxu0 0.0
        %915 = vmatpush1.msra.mxu0 0.0
        %916 = vmatprep.subr.mxu0 0.0
        %917 = vmatpush1.msra.mxu0 0.0
        %918 = vmatprep.subr.mxu0 0.0
        %919 = vmatpush1.msra.mxu0 0.0
        %920 = vmatprep.subr.mxu0 0.0
        %921 = vmatpush1.msra.mxu0 0.0
        %922 = vmatprep.subr.mxu0 0.0
        %923 = vmatpush1.msra.mxu0 0.0
        %924 = vmatprep.subr.mxu0 0.0
        %925 = vmatpush1.msra.mxu0 0.0
        %926 = vmatprep.subr.mxu0 0.0
        %927 = vmatpush1.msra.mxu0 0.0
        %928 = vmatprep.subr.mxu0 0.0
        %929 = vmatpush1.msra.mxu0 0.0
        %930 = vmatprep.subr.mxu0 0.0
        %931 = vmatpush1.msra.mxu0 0.0
        %932 = vmatprep.subr.mxu0 0.0
        %933 = vmatpush1.msra.mxu0 0.0
        %934 = vmatprep.mubr.f32.mxu0 0.0
        %935 = vmatmul.mubr.f32.gmra.mrb[0].mxu0 %v680
        %v936 = vpop.f32.mrb[0].mxu0
        %v937 = vadd.f32 %v868, %v936
        %v938 = vpop.f32.mrb[0].mxu0
        %939 = vdwg.mxu0
        %v940 = vpack.c.bf16 %v937, %v937
        %s941 = scalar_lea.vmem [#allocation2], 8
        %v942 = vld [vmem:[%s941] sm:$0xff]
        %s943 = scalar_lea.vmem [#allocation3], 8
        %v944 = vld [vmem:[%s943] sm:$0xff]
        %v946 = vsel %vm755, %v940, 0
        %v949 = vsel %vm755, %v942, 0
        %951 = vmatprep.subr.bf16.mxu0 0
        %952 = vmatpush1.bf16.xpose.msra.mxu0 %v949
        %953 = vmatprep.subr.bf16.mxu0 0
        %954 = vmatpush1.bf16.xpose.msra.mxu0 0
        %955 = vmatprep.subr.bf16.mxu0 0
        %956 = vmatpush1.bf16.xpose.msra.mxu0 0
        %957 = vmatprep.subr.bf16.mxu0 0
        %958 = vmatpush1.bf16.xpose.msra.mxu0 0
        %959 = vmatprep.subr.bf16.mxu0 0
        %960 = vmatpush1.bf16.xpose.msra.mxu0 0
        %961 = vmatprep.subr.bf16.mxu0 0
        %962 = vmatpush1.bf16.xpose.msra.mxu0 0
        %963 = vmatprep.subr.bf16.mxu0 0
        %964 = vmatpush1.bf16.xpose.msra.mxu0 0
        %965 = vmatprep.subr.bf16.mxu0 0
        %966 = vmatpush1.bf16.xpose.msra.mxu0 0
        %967 = vmatprep.subr.bf16.mxu0 0
        %968 = vmatpush1.bf16.xpose.msra.mxu0 0
        %969 = vmatprep.subr.bf16.mxu0 0
        %970 = vmatpush1.bf16.xpose.msra.mxu0 0
        %971 = vmatprep.subr.bf16.mxu0 0
        %972 = vmatpush1.bf16.xpose.msra.mxu0 0
        %973 = vmatprep.subr.bf16.mxu0 0
        %974 = vmatpush1.bf16.xpose.msra.mxu0 0
        %975 = vmatprep.subr.bf16.mxu0 0
        %976 = vmatpush1.bf16.xpose.msra.mxu0 0
        %977 = vmatprep.subr.bf16.mxu0 0
        %978 = vmatpush1.bf16.xpose.msra.mxu0 0
        %979 = vmatprep.subr.bf16.mxu0 0
        %980 = vmatpush1.bf16.xpose.msra.mxu0 0
        %981 = vmatprep.subr.bf16.mxu0 0
        %982 = vmatpush1.bf16.xpose.msra.mxu0 0
        %983 = vmatprep.mubr.bf16.mxu0 0
        %984 = vmatmul.mubr.bf16.gmra.mrb[0].mxu0 %v946
        %v985 = vpop.f32.mrb[0].mxu0
        %v986 = vadd.f32 0.0, %v985
        %v987 = vpop.f32.mrb[0].mxu0
        %v988 = vpop.f32.mrb[0].mxu0
        %v989 = vpop.f32.mrb[0].mxu0
        %990 = vdwg.mxu0
        %v991 = vsel %vm755, %v986, -inf
        %992 = vmax.xlane.f32.xlu0 %v991
        %v993 = vpop.xlane.xlu0 %992
        %v994 = vsub.f32 %v986, %v993
        %v995 = vmul.f32 %v994, 1.442695
        %v996 = vpow.pop %v995
        %v997 = vsel %vm755, %v996, 0.0
        %998 = vadd.xlane.f32.xlu0 %v997
        %v999 = vpop.xlane.xlu0 %998
        %v1000 = vrcp.pop %v999
        %v1001 = vmul.f32 %v996, %v1000
        %v1002 = vpack.c.bf16 %v1001, %v1001
        %v1004 = vsel %vm755, %v1002, 0
        %1006 = vmatprep.subr.bf16.mxu0 0
        %1007 = vmatpush1.bf16.msra.mxu0 %v944
        %1008 = vmatprep.subr.bf16.mxu0 0
        %1009 = vmatpush1.bf16.msra.mxu0 0
        %1010 = vmatprep.subr.bf16.mxu0 0
        %1011 = vmatpush1.bf16.msra.mxu0 0
        %1012 = vmatprep.subr.bf16.mxu0 0
        %1013 = vmatpush1.bf16.msra.mxu0 0
        %1014 = vmatprep.subr.bf16.mxu0 0
        %1015 = vmatpush1.bf16.msra.mxu0 0
        %1016 = vmatprep.subr.bf16.mxu0 0
        %1017 = vmatpush1.bf16.msra.mxu0 0
        %1018 = vmatprep.subr.bf16.mxu0 0
        %1019 = vmatpush1.bf16.msra.mxu0 0
        %1020 = vmatprep.subr.bf16.mxu0 0
        %1021 = vmatpush1.bf16.msra.mxu0 0
        %1022 = vmatprep.subr.bf16.mxu0 0
        %1023 = vmatpush1.bf16.msra.mxu0 0
        %1024 = vmatprep.subr.bf16.mxu0 0
        %1025 = vmatpush1.bf16.msra.mxu0 0
        %1026 = vmatprep.subr.bf16.mxu0 0
        %1027 = vmatpush1.bf16.msra.mxu0 0
        %1028 = vmatprep.subr.bf16.mxu0 0
        %1029 = vmatpush1.bf16.msra.mxu0 0
        %1030 = vmatprep.subr.bf16.mxu0 0
        %1031 = vmatpush1.bf16.msra.mxu0 0
        %1032 = vmatprep.subr.bf16.mxu0 0
        %1033 = vmatpush1.bf16.msra.mxu0 0
        %1034 = vmatprep.subr.bf16.mxu0 0
        %1035 = vmatpush1.bf16.msra.mxu0 0
        %1036 = vmatprep.subr.bf16.mxu0 0
        %1037 = vmatpush1.bf16.msra.mxu0 0
        %1038 = vmatprep.mubr.bf16.mxu0 0
        %1039 = vmatmul.mubr.bf16.gmra.mrb[0].mxu0 %v1004
        %v1040 = vpop.f32.mrb[0].mxu0
        %v1041 = vadd.f32 0.0, %v1040
        %v1042 = vpop.f32.mrb[0].mxu0
        %v1043 = vpop.f32.mrb[0].mxu0
        %v1044 = vpop.f32.mrb[0].mxu0
        %1045 = vdwg.mxu0
        %1047 = vrot.lane.b32.xlu0 %v1041, 16
        %v1048 = vpop.permute.xlu0 %1047
        %v1050 = vsel %vm755, %v852, %v1048
        %v1051 = vsel %vm678, %v1050, 0.0
        %1052 = vst [vmem:[%s285] sm:$0xff] %v1051
        %s1053 = sand.u32 %s195, 1
        %s1054 = scalar_lea.sflag [#allocation5], %s1053
        %s1055 = sand.u32 %s195, 1
        %s1056 = smul.addr %s1055, 8
        %s1057 = scalar_lea.vmem [#allocation4], %s1056
        // Predicated region
        $region53: #{tpu_custom_call.1} parent=47 // pred_check
          %p1058 = pneg %p205
        $region54: #{tpu_custom_call.1} parent=47 // pred_check_branch
          %1060 = sbr.rel (%p1058) target = $region56
        $region55: #{tpu_custom_call.1} parent=47 // pred_region
          %s1062 = ssub.s32 128, 128
          %1063 = vsyncadd %s1054, %s1062
          %s1064 = smul.addr %s25, 2
          %s1065 = sadd.s32 %s26, %s1064
          %s1066 = smul.addr %s1065, 128
          %s1067 = scalar_lea.hbm %s7, %s1066
          %s1069 = sshll.u32 %s1057, 4
          %s1070 = int_to_ptr.vmem [resolvable:$true] %s1069
          %1072 = dma.vmem_to_hbm [thread:$0]  %s1070, 128, %s1067, %s1054
        $region56: #{tpu_custom_call.1} parent=47 // pred_fallthru
          _
      $region48: #{tpu_custom_call.1} parent=5 // pred_fallthru
        _
      %p1073 = scmp.le.s32.totalorder 2, %s16
      // Predicated region
      $region57: #{tpu_custom_call.1} parent=5 // pred_check
        %p1074 = pneg %p1073
      $region58: #{tpu_custom_call.1} parent=5 // pred_check_branch
        %1076 = sbr.rel (%p1074) target = $region60
      $region59: #{tpu_custom_call.1} parent=5 // pred_region
        %s1077 = ssub.s32 %s16, 2
        // Predicated region
        $region61: #{tpu_custom_call.1} parent=59 // pred_check
          %p1078 = pneg %p211
        $region62: #{tpu_custom_call.1} parent=59 // pred_check_branch
          %1080 = sbr.rel (%p1078) target = $region64
        $region63: #{tpu_custom_call.1} parent=59 // pred_region
          %s1081 = sand.u32 %s196, 1
          %s1082 = scalar_lea.sflag [#allocation5], %s1081
          %s1083 = sand.u32 %s196, 1
          %s1084 = smul.addr %s1083, 8
          %s1085 = scalar_lea.vmem [#allocation4], %s1084
          %1086 = dma.done %s1082, 128
        $region64: #{tpu_custom_call.1} parent=59 // pred_fallthru
          _
      $region60: #{tpu_custom_call.1} parent=5 // pred_fallthru
        _
    $region6: #{tpu_custom_call.1} parent=1 // loop_footer
      %s20 = sadd.s32 1, %s16
    $region7: #{tpu_custom_call.1} parent=1 // loop_footer_branch
      %15 = sbr.rel target = $region3
    $region8: #{tpu_custom_call.1} parent=1 // loop_exit
      _
    %1087 = vsyncpa [#allocation5], 1
    %s1088 = scalar_lea.sflag [#allocation5], 1
    %1089 = vsyncpa %s1088, 1

// kernel: tpu_custom_call.1
$region0: #{tpu_custom_call.1}
  #allocation0 [shape = 'u32[]', space=smem, size = 0x4, offset = 0x4, fixed_abs, tag = 'smem constant byte address 0x4 - core index']
  #allocation1 [shape = 'u32[144,128]{1,0:T(1,128)}', space=vmem, size = 0x12000, scoped, tag = 'internal scratch']
  #allocation2 [shape = 'bf16[2,16,16]{2,1,0:T(16,128)(2,1)}', space=vmem, size = 0x2000, scoped, tag = 'scratch operand']
  #allocation3 [shape = 'bf16[2,16,16]{2,1,0:T(16,128)(2,1)}', space=vmem, size = 0x2000, scoped, tag = 'scratch operand']
  %s0 = inlined_call_operand.vmem [shape: f32[2,16,32], index: 0, kind: input, shape index: {}]
  %s1 = inlined_call_operand.vmem [shape: f32[2,32,16], index: 1, kind: input, shape index: {}]
  %s2 = inlined_call_operand.vmem [shape: f32[2,1,16], index: 2, kind: input, shape index: {}]
  %s3 = inlined_call_operand.vmem [shape: f32[2,32,16], index: 3, kind: input, shape index: {}]
  %s4 = inlined_call_operand.vmem [shape: f32[2,1,16], index: 4, kind: input, shape index: {}]
  %s5 = inlined_call_operand.vmem [shape: f32[2,32,16], index: 5, kind: input, shape index: {}]
  %s6 = inlined_call_operand.vmem [shape: f32[2,1,16], index: 6, kind: input, shape index: {}]
  %s7 = inlined_call_operand.hbm [shape: f32[2,16,128], index: 7, kind: output, shape index: {}]
  %s8 = sld [smem:[#allocation0]]
  $region65: #{tpu_custom_call.1} parent=0
    _
  %s10 = ssub.s32 1, %s8
  %s11 = scalar_select 0, %s10, %s8
  $region1: #{tpu_custom_call.1} parent=0
    #allocation4 [shape = 'u8[8192]{0}', space=vmem, size = 0x2000, scoped, tag = 'output window, operand 0']
    #allocation5 [shape = 's32[2]{0}', space=sflag, size = 0x8, scoped, tag = 'scoped memory for tpu_custom_call.1']
    %12 = vsyncpa [#allocation5], 0
    %s13 = scalar_lea.sflag [#allocation5], 1
    %14 = vsyncpa %s13, 0
    loop: start=0, step=1, limit=6
    $region2: #{tpu_custom_call.1} parent=1 // loop_pre_header
      _
    $region3: #{tpu_custom_call.1} parent=1 // loop_header
      %s16 = sphi 0, %s20
      %p17 = scmp.ge.s32.totalorder %s16, 6
      %s23 = sphi 0, %s35
      %s24 = sphi 0, %s31
      %s25 = sphi 0, %s23
      %s26 = sphi 0, %s24
      %s27 = sphi 0, %s25
      %s28 = sphi 0, %s26
      %s38 = sphi 0, %s40
      %s41 = sphi 0, %s38
      %s42 = sphi 0, %s41
      %s58 = sphi 0, %s42
      %s62 = sphi 0, %s62
      %s64 = sphi 0, %s62
      %s65 = sphi 0, %s64
      %s79 = sphi 0, %s65
      %s83 = sphi 0, %s83
      %s85 = sphi 0, %s83
      %s86 = sphi 0, %s85
      %s100 = sphi 0, %s86
      %s104 = sphi 0, %s104
      %s106 = sphi 0, %s104
      %s107 = sphi 0, %s106
      %s121 = sphi 0, %s107
      %s125 = sphi 0, %s125
      %s127 = sphi 0, %s125
      %s128 = sphi 0, %s127
      %s142 = sphi 0, %s128
      %s146 = sphi 0, %s146
      %s148 = sphi 0, %s146
      %s149 = sphi 0, %s148
      %s163 = sphi 0, %s149
      %s167 = sphi 0, %s167
      %s169 = sphi 0, %s167
      %s170 = sphi 0, %s169
      %s184 = sphi 0, %s170
      %s192 = sphi 0, %s194
      %s195 = sphi 0, %s192
      %s196 = sphi 0, %s195
      %s212 = sphi 0, %s196
    $region4: #{tpu_custom_call.1} parent=1 // loop_header_branch
      %19 = sbr.rel (%p17) target = $region8
    $region5: #{tpu_custom_call.1} parent=1 // loop_body
      %s21 = ssub.s32 %s16, 1
      %s22 = ssub.s32 %s16, 2
      %s29 = sadd.s32 1, %s24
      %p30 = scmp.ge.s32.totalorder %s29, 2
      %s31 = scalar_select %p30, 0, %s29
      %s32 = sadd.s32 1, %s23
      %s33 = scalar_select %p30, %s32, %s23
      %p34 = scmp.ge.s32.totalorder %s33, 2
      %s35 = scalar_select %p34, 0, %s33
      %s36 = ssub.s32 %s23, %s35
      %p37 = scmp.eq.s32.totalorder %s36, 0
      %s39 = sadd.s32 %s38, 1
      %s40 = scalar_select %p37, %s38, %s39
      %p43 = pneg %p37
      %p44 = scmp.eq.s32.totalorder %s16, 3
      %p45 = por %p43, %p44
      %p46 = scmp.ne.s32.totalorder %s38, %s41
      %p47 = scmp.eq.s32.totalorder %s16, 0
      %p48 = por %p46, %p47
      %p49 = scmp.ne.s32.totalorder %s38, %s41
      %p50 = scmp.eq.s32.totalorder %s21, 3
      %p51 = por %p49, %p50
      %p52 = scmp.ne.s32.totalorder %s41, %s42
      %p53 = scmp.eq.s32.totalorder %s21, 0
      %p54 = por %p52, %p53
      %p55 = scmp.ne.s32.totalorder %s41, %s42
      %p56 = scmp.eq.s32.totalorder %s22, 3
      %p57 = por %p55, %p56
      %p59 = scmp.ne.s32.totalorder %s42, %s58
      %p60 = scmp.eq.s32.totalorder %s22, 0
      %p61 = por %p59, %p60
      %s63 = sadd.s32 %s62, 1
      %p66 = scmp.eq.s32.totalorder %s16, 3
      %p67 = scmp.ne.s32.totalorder %s62, %s64
      %p68 = scmp.eq.s32.totalorder %s16, 0
      %p69 = por %p67, %p68
      %p70 = scmp.ne.s32.totalorder %s62, %s64
      %p71 = scmp.eq.s32.totalorder %s21, 3
      %p72 = por %p70, %p71
      %p73 = scmp.ne.s32.totalorder %s64, %s65
      %p74 = scmp.eq.s32.totalorder %s21, 0
      %p75 = por %p73, %p74
      %p76 = scmp.ne.s32.totalorder %s64, %s65
      %p77 = scmp.eq.s32.totalorder %s22, 3
      %p78 = por %p76, %p77
      %p80 = scmp.ne.s32.totalorder %s65, %s79
      %p81 = scmp.eq.s32.totalorder %s22, 0
      %p82 = por %p80, %p81
      %s84 = sadd.s32 %s83, 1
      %p87 = scmp.eq.s32.totalorder %s16, 3
      %p88 = scmp.ne.s32.totalorder %s83, %s85
      %p89 = scmp.eq.s32.totalorder %s16, 0
      %p90 = por %p88, %p89
      %p91 = scmp.ne.s32.totalorder %s83, %s85
      %p92 = scmp.eq.s32.totalorder %s21, 3
      %p93 = por %p91, %p92
      %p94 = scmp.ne.s32.totalorder %s85, %s86
      %p95 = scmp.eq.s32.totalorder %s21, 0
      %p96 = por %p94, %p95
      %p97 = scmp.ne.s32.totalorder %s85, %s86
      %p98 = scmp.eq.s32.totalorder %s22, 3
      %p99 = por %p97, %p98
      %p101 = scmp.ne.s32.totalorder %s86, %s100
      %p102 = scmp.eq.s32.totalorder %s22, 0
      %p103 = por %p101, %p102
      %s105 = sadd.s32 %s104, 1
      %p108 = scmp.eq.s32.totalorder %s16, 3
      %p109 = scmp.ne.s32.totalorder %s104, %s106
      %p110 = scmp.eq.s32.totalorder %s16, 0
      %p111 = por %p109, %p110
      %p112 = scmp.ne.s32.totalorder %s104, %s106
      %p113 = scmp.eq.s32.totalorder %s21, 3
      %p114 = por %p112, %p113
      %p115 = scmp.ne.s32.totalorder %s106, %s107
      %p116 = scmp.eq.s32.totalorder %s21, 0
      %p117 = por %p115, %p116
      %p118 = scmp.ne.s32.totalorder %s106, %s107
      %p119 = scmp.eq.s32.totalorder %s22, 3
      %p120 = por %p118, %p119
      %p122 = scmp.ne.s32.totalorder %s107, %s121
      %p123 = scmp.eq.s32.totalorder %s22, 0
      %p124 = por %p122, %p123
      %s126 = sadd.s32 %s125, 1
      %p129 = scmp.eq.s32.totalorder %s16, 3
      %p130 = scmp.ne.s32.totalorder %s125, %s127
      %p131 = scmp.eq.s32.totalorder %s16, 0
      %p132 = por %p130, %p131
      %p133 = scmp.ne.s32.totalorder %s125, %s127
      %p134 = scmp.eq.s32.totalorder %s21, 3
      %p135 = por %p133, %p134
      %p136 = scmp.ne.s32.totalorder %s127, %s128
      %p137 = scmp.eq.s32.totalorder %s21, 0
      %p138 = por %p136, %p137
      %p139 = scmp.ne.s32.totalorder %s127, %s128
      %p140 = scmp.eq.s32.totalorder %s22, 3
      %p141 = por %p139, %p140
      %p143 = scmp.ne.s32.totalorder %s128, %s142
      %p144 = scmp.eq.s32.totalorder %s22, 0
      %p145 = por %p143, %p144
      %s147 = sadd.s32 %s146, 1
      %p150 = scmp.eq.s32.totalorder %s16, 3
      %p151 = scmp.ne.s32.totalorder %s146, %s148
      %p152 = scmp.eq.s32.totalorder %s16, 0
      %p153 = por %p151, %p152
      %p154 = scmp.ne.s32.totalorder %s146, %s148
      %p155 = scmp.eq.s32.totalorder %s21, 3
      %p156 = por %p154, %p155
      %p157 = scmp.ne.s32.totalorder %s148, %s149
      %p158 = scmp.eq.s32.totalorder %s21, 0
      %p159 = por %p157, %p158
      %p160 = scmp.ne.s32.totalorder %s148, %s149
      %p161 = scmp.eq.s32.totalorder %s22, 3
      %p162 = por %p160, %p161
      %p164 = scmp.ne.s32.totalorder %s149, %s163
      %p165 = scmp.eq.s32.totalorder %s22, 0
      %p166 = por %p164, %p165
      %s168 = sadd.s32 %s167, 1
      %p171 = scmp.eq.s32.totalorder %s16, 3
      %p172 = scmp.ne.s32.totalorder %s167, %s169
      %p173 = scmp.eq.s32.totalorder %s16, 0
      %p174 = por %p172, %p173
      %p175 = scmp.ne.s32.totalorder %s167, %s169
      %p176 = scmp.eq.s32.totalorder %s21, 3
      %p177 = por %p175, %p176
      %p178 = scmp.ne.s32.totalorder %s169, %s170
      %p179 = scmp.eq.s32.totalorder %s21, 0
      %p180 = por %p178, %p179
      %p181 = scmp.ne.s32.totalorder %s169, %s170
      %p182 = scmp.eq.s32.totalorder %s22, 3
      %p183 = por %p181, %p182
      %p185 = scmp.ne.s32.totalorder %s170, %s184
      %p186 = scmp.eq.s32.totalorder %s22, 0
      %p187 = por %p185, %p186
      %s188 = ssub.s32 %s23, %s35
      %s189 = ssub.s32 %s24, %s31
      %s190 = sor.u32 %s188, %s189
      %p191 = scmp.eq.s32.totalorder %s190, 0
      %s193 = sadd.s32 %s192, 1
      %s194 = scalar_select %p191, %s192, %s193
      %p197 = pneg %p191
      %p198 = scmp.eq.s32.totalorder %s16, 3
      %p199 = por %p197, %p198
      %p200 = scmp.ne.s32.totalorder %s192, %s195
      %p201 = scmp.eq.s32.totalorder %s16, 0
      %p202 = por %p200, %p201
      %p203 = scmp.ne.s32.totalorder %s192, %s195
      %p204 = scmp.eq.s32.totalorder %s21, 3
      %p205 = por %p203, %p204
      %p206 = scmp.ne.s32.totalorder %s195, %s196
      %p207 = scmp.eq.s32.totalorder %s21, 0
      %p208 = por %p206, %p207
      %p209 = scmp.ne.s32.totalorder %s195, %s196
      %p210 = scmp.eq.s32.totalorder %s22, 3
      %p211 = por %p209, %p210
      %p213 = scmp.ne.s32.totalorder %s196, %s212
      %p214 = scmp.eq.s32.totalorder %s22, 0
      %p215 = por %p213, %p214
      %p216 = scmp.le.s32.totalorder 1, %s16
      %p217 = scmp.lt.s32.totalorder %s16, 5
      %p218 = pnand %p216, %p217
      %p219 = pneg %p218
      // Predicated region
      $region9: #{tpu_custom_call.1} parent=5 // pred_check
        _
      $region10: #{tpu_custom_call.1} parent=5 // pred_check_branch
        %221 = sbr.rel (%p218) target = $region12
      $region11: #{tpu_custom_call.1} parent=5 // pred_region
        %s222 = ssub.s32 %s16, 1
        // Predicated region
        $region13: #{tpu_custom_call.1} parent=11 // pred_check
          %p223 = pneg %p75
        $region14: #{tpu_custom_call.1} parent=11 // pred_check_branch
          %225 = sbr.rel (%p223) target = $region16
        $region15: #{tpu_custom_call.1} parent=11 // pred_region
          _
        $region16: #{tpu_custom_call.1} parent=11 // pred_fallthru
          _
        // Predicated region
        $region17: #{tpu_custom_call.1} parent=11 // pred_check
          %p226 = pneg %p96
        $region18: #{tpu_custom_call.1} parent=11 // pred_check_branch
          %228 = sbr.rel (%p226) target = $region20
        $region19: #{tpu_custom_call.1} parent=11 // pred_region
          _
        $region20: #{tpu_custom_call.1} parent=11 // pred_fallthru
          _
        // Predicated region
        $region21: #{tpu_custom_call.1} parent=11 // pred_check
          %p229 = pneg %p117
        $region22: #{tpu_custom_call.1} parent=11 // pred_check_branch
          %231 = sbr.rel (%p229) target = $region24
        $region23: #{tpu_custom_call.1} parent=11 // pred_region
          _
        $region24: #{tpu_custom_call.1} parent=11 // pred_fallthru
          _
        // Predicated region
        $region25: #{tpu_custom_call.1} parent=11 // pred_check
          %p232 = pneg %p138
        $region26: #{tpu_custom_call.1} parent=11 // pred_check_branch
          %234 = sbr.rel (%p232) target = $region28
        $region27: #{tpu_custom_call.1} parent=11 // pred_region
          _
        $region28: #{tpu_custom_call.1} parent=11 // pred_fallthru
          _
        // Predicated region
        $region29: #{tpu_custom_call.1} parent=11 // pred_check
          %p235 = pneg %p159
        $region30: #{tpu_custom_call.1} parent=11 // pred_check_branch
          %237 = sbr.rel (%p235) target = $region32
        $region31: #{tpu_custom_call.1} parent=11 // pred_region
          _
        $region32: #{tpu_custom_call.1} parent=11 // pred_fallthru
          _
        // Predicated region
        $region33: #{tpu_custom_call.1} parent=11 // pred_check
          %p238 = pneg %p180
        $region34: #{tpu_custom_call.1} parent=11 // pred_check_branch
          %240 = sbr.rel (%p238) target = $region36
        $region35: #{tpu_custom_call.1} parent=11 // pred_region
          _
        $region36: #{tpu_custom_call.1} parent=11 // pred_fallthru
          _
      $region12: #{tpu_custom_call.1} parent=5 // pred_fallthru
        _
      %p241 = scmp.lt.s32.totalorder %s16, 4
      // Predicated region
      $region37: #{tpu_custom_call.1} parent=5 // pred_check
        %p242 = pneg %p241
      $region38: #{tpu_custom_call.1} parent=5 // pred_check_branch
        %244 = sbr.rel (%p242) target = $region40
      $region39: #{tpu_custom_call.1} parent=5 // pred_region
        // Predicated region
        $region41: #{tpu_custom_call.1} parent=39 // pred_check
          %p245 = pneg %p48
        $region42: #{tpu_custom_call.1} parent=39 // pred_check_branch
          %247 = sbr.rel (%p245) target = $region44
        $region43: #{tpu_custom_call.1} parent=39 // pred_region
          %p248 = scmp.lt.s32.totalorder %s23, 1
          %s249 = scalar_select %p248, %s23, 1
          %s250 = smul.addr %s249, 2
          %s251 = smul.addr %s250, 8
          %s252 = scalar_lea.vmem %s0, %s251
        $region44: #{tpu_custom_call.1} parent=39 // pred_fallthru
          _
      $region40: #{tpu_custom_call.1} parent=5 // pred_fallthru
        _
      %p253 = scmp.le.s32.totalorder 1, %s16
      %p254 = scmp.lt.s32.totalorder %s16, 5
      %p255 = pnand %p253, %p254
      %p256 = pneg %p255
      // Predicated region
      $region45: #{tpu_custom_call.1} parent=5 // pred_check
        _
      $region46: #{tpu_custom_call.1} parent=5 // pred_check_branch
        %258 = sbr.rel (%p255) target = $region48
      $region47: #{tpu_custom_call.1} parent=5 // pred_region
        %s259 = ssub.s32 %s16, 1
        %p260 = scmp.lt.s32.totalorder %s25, 1
        %s261 = scalar_select %p260, %s25, 1
        %s262 = smul.addr %s261, 2
        %s263 = smul.addr %s262, 8
        %s264 = scalar_lea.vmem %s0, %s263
        %p265 = pneg %p54
        %p266 = pneg %p51
        %p267 = pneg %p75
        %p268 = pneg %p72
        %p269 = pneg %p96
        %p270 = pneg %p93
        %p271 = pneg %p117
        %p272 = pneg %p114
        %p273 = pneg %p138
        %p274 = pneg %p135
        %p275 = pneg %p159
        %p276 = pneg %p156
        %p277 = pneg %p180
        %p278 = pneg %p177
        %p279 = pneg %p208
        %p280 = pneg %p205
        %s281 = sand.u32 %s195, 1
        %s282 = scalar_lea.sflag [#allocation5], %s281
        %s283 = sand.u32 %s195, 1
        %s284 = smul.addr %s283, 8
        %s285 = scalar_lea.vmem [#allocation4], %s284
        %p286 = scmp.lt.s32.totalorder %s25, 1
        %s287 = scalar_select %p286, %s25, 1
        %s288 = smul.addr %s287, 2
        %s289 = smul.addr %s288, 8
        %s290 = scalar_lea.vmem %s0, %s289
        %p292 = scmp.eq.s32.totalorder %s26, 0
        // Predicated region
        $region49: #{tpu_custom_call.1} parent=47 // pred_check
          %p293 = pneg %p292
        $region50: #{tpu_custom_call.1} parent=47 // pred_check_branch
          %295 = sbr.rel (%p293) target = $region52
        $region51: #{tpu_custom_call.1} parent=47 // pred_region
          %v296 = vld [vmem:[%s290] sm:$0xff]
          %v297 = vld [vmem:[%s290 + $0x8] sm:$0xff]
          %v298 = vld [vmem:[%s3] sm:$0xff]
          %v299 = vld [vmem:[%s3 + $0x8] sm:$0xff]
          %v300 = vld [vmem:[%s3 + $0x10] sm:$0xff]
          %v301 = vld [vmem:[%s3 + $0x18] sm:$0xff]
          %v302 = vld [vmem:[%s4] sm:$0x1]
          %v304 = vlaneseq
          %v305 = vshrl.u32 %v304, 7
          %v306 = vsub.s32 0, %v305
          %v307 = vrot.slane %v302, %v306
          %vm309 = vcmask 261120
          %v311 = vsel %vm309, %v296, 0
          %v314 = vsel %vm309, %v297, 0
          %316 = vmatprep.subr.mxu0 0.0
          %317 = vmatpush1.msra.mxu0 %v298
          %318 = vmatprep.subr.mxu0 0.0
          %319 = vmatpush1.msra.mxu0 %v299
          %320 = vmatprep.subr.mxu0 0.0
          %321 = vmatpush1.msra.mxu0 %v300
          %322 = vmatprep.subr.mxu0 0.0
          %323 = vmatpush1.msra.mxu0 %v301
          %324 = vmatprep.subr.mxu0 0.0
          %325 = vmatpush1.msra.mxu0 0.0
          %326 = vmatprep.subr.mxu0 0.0
          %327 = vmatpush1.msra.mxu0 0.0
          %328 = vmatprep.subr.mxu0 0.0
          %329 = vmatpush1.msra.mxu0 0.0
          %330 = vmatprep.subr.mxu0 0.0
          %331 = vmatpush1.msra.mxu0 0.0
          %332 = vmatprep.subr.mxu0 0.0
          %333 = vmatpush1.msra.mxu0 0.0
          %334 = vmatprep.subr.mxu0 0.0
          %335 = vmatpush1.msra.mxu0 0.0
          %336 = vmatprep.subr.mxu0 0.0
          %337 = vmatpush1.msra.mxu0 0.0
          %338 = vmatprep.subr.mxu0 0.0
          %339 = vmatpush1.msra.mxu0 0.0
          %340 = vmatprep.subr.mxu0 0.0
          %341 = vmatpush1.msra.mxu0 0.0
          %342 = vmatprep.subr.mxu0 0.0
          %343 = vmatpush1.msra.mxu0 0.0
          %344 = vmatprep.subr.mxu0 0.0
          %345 = vmatpush1.msra.mxu0 0.0
          %346 = vmatprep.subr.mxu0 0.0
          %347 = vmatpush1.msra.mxu0 0.0
          %348 = vmatprep.subr.mxu0 0.0
          %349 = vmatpush1.msra.mxu0 0.0
          %350 = vmatprep.subr.mxu0 0.0
          %351 = vmatpush1.msra.mxu0 0.0
          %352 = vmatprep.subr.mxu0 0.0
          %353 = vmatpush1.msra.mxu0 0.0
          %354 = vmatprep.subr.mxu0 0.0
          %355 = vmatpush1.msra.mxu0 0.0
          %356 = vmatprep.subr.mxu0 0.0
          %357 = vmatpush1.msra.mxu0 0.0
          %358 = vmatprep.subr.mxu0 0.0
          %359 = vmatpush1.msra.mxu0 0.0
          %360 = vmatprep.subr.mxu0 0.0
          %361 = vmatpush1.msra.mxu0 0.0
          %362 = vmatprep.subr.mxu0 0.0
          %363 = vmatpush1.msra.mxu0 0.0
          %364 = vmatprep.subr.mxu0 0.0
          %365 = vmatpush1.msra.mxu0 0.0
          %366 = vmatprep.subr.mxu0 0.0
          %367 = vmatpush1.msra.mxu0 0.0
          %368 = vmatprep.subr.mxu0 0.0
          %369 = vmatpush1.msra.mxu0 0.0
          %370 = vmatprep.subr.mxu0 0.0
          %371 = vmatpush1.msra.mxu0 0.0
          %372 = vmatprep.subr.mxu0 0.0
          %373 = vmatpush1.msra.mxu0 0.0
          %374 = vmatprep.subr.mxu0 0.0
          %375 = vmatpush1.msra.mxu0 0.0
          %376 = vmatprep.subr.mxu0 0.0
          %377 = vmatpush1.msra.mxu0 0.0
          %378 = vmatprep.subr.mxu0 0.0
          %379 = vmatpush1.msra.mxu0 0.0
          %380 = vmatprep.mubr.f32.mxu0 0.0
          %381 = vmatmul.mubr.f32.gmra.mrb[0].mxu0 %v311
          %v382 = vpop.f32.mrb[0].mxu0
          %v383 = vadd.f32 %v307, %v382
          %v384 = vpop.f32.mrb[0].mxu0
          %385 = vmatprep.mubr.f32.mxu0 0.0
          %386 = vmatmul.mubr.f32.gmra.mrb[0].mxu0 %v314
          %v387 = vpop.f32.mrb[0].mxu0
          %v388 = vadd.f32 %v307, %v387
          %v389 = vpop.f32.mrb[0].mxu0
          %390 = vdwg.mxu0
          %v391 = vld [vmem:[%s5] sm:$0xff]
          %v392 = vld [vmem:[%s5 + $0x8] sm:$0xff]
          %v393 = vld [vmem:[%s5 + $0x10] sm:$0xff]
          %v394 = vld [vmem:[%s5 + $0x18] sm:$0xff]
          %v395 = vld [vmem:[%s6] sm:$0x1]
          %v397 = vlaneseq
          %v398 = vshrl.u32 %v397, 7
          %v399 = vsub.s32 0, %v398
          %v400 = vrot.slane %v395, %v399
          %402 = vmatprep.subr.mxu0 0.0
          %403 = vmatpush1.msra.mxu0 %v391
          %404 = vmatprep.subr.mxu0 0.0
          %405 = vmatpush1.msra.mxu0 %v392
          %406 = vmatprep.subr.mxu0 0.0
          %407 = vmatpush1.msra.mxu0 %v393
          %408 = vmatprep.subr.mxu0 0.0
          %409 = vmatpush1.msra.mxu0 %v394
          %410 = vmatprep.subr.mxu0 0.0
          %411 = vmatpush1.msra.mxu0 0.0
          %412 = vmatprep.subr.mxu0 0.0
          %413 = vmatpush1.msra.mxu0 0.0
          %414 = vmatprep.subr.mxu0 0.0
          %415 = vmatpush1.msra.mxu0 0.0
          %416 = vmatprep.subr.mxu0 0.0
          %417 = vmatpush1.msra.mxu0 0.0
          %418 = vmatprep.subr.mxu0 0.0
          %419 = vmatpush1.msra.mxu0 0.0
          %420 = vmatprep.subr.mxu0 0.0
          %421 = vmatpush1.msra.mxu0 0.0
          %422 = vmatprep.subr.mxu0 0.0
          %423 = vmatpush1.msra.mxu0 0.0
          %424 = vmatprep.subr.mxu0 0.0
          %425 = vmatpush1.msra.mxu0 0.0
          %426 = vmatprep.subr.mxu0 0.0
          %427 = vmatpush1.msra.mxu0 0.0
          %428 = vmatprep.subr.mxu0 0.0
          %429 = vmatpush1.msra.mxu0 0.0
          %430 = vmatprep.subr.mxu0 0.0
          %431 = vmatpush1.msra.mxu0 0.0
          %432 = vmatprep.subr.mxu0 0.0
          %433 = vmatpush1.msra.mxu0 0.0
          %434 = vmatprep.subr.mxu0 0.0
          %435 = vmatpush1.msra.mxu0 0.0
          %436 = vmatprep.subr.mxu0 0.0
          %437 = vmatpush1.msra.mxu0 0.0
          %438 = vmatprep.subr.mxu0 0.0
          %439 = vmatpush1.msra.mxu0 0.0
          %440 = vmatprep.subr.mxu0 0.0
          %441 = vmatpush1.msra.mxu0 0.0
          %442 = vmatprep.subr.mxu0 0.0
          %443 = vmatpush1.msra.mxu0 0.0
          %444 = vmatprep.subr.mxu0 0.0
          %445 = vmatpush1.msra.mxu0 0.0
          %446 = vmatprep.subr.mxu0 0.0
          %447 = vmatpush1.msra.mxu0 0.0
          %448 = vmatprep.subr.mxu0 0.0
          %449 = vmatpush1.msra.mxu0 0.0
          %450 = vmatprep.subr.mxu0 0.0
          %451 = vmatpush1.msra.mxu0 0.0
          %452 = vmatprep.subr.mxu0 0.0
          %453 = vmatpush1.msra.mxu0 0.0
          %454 = vmatprep.subr.mxu0 0.0
          %455 = vmatpush1.msra.mxu0 0.0
          %456 = vmatprep.subr.mxu0 0.0
          %457 = vmatpush1.msra.mxu0 0.0
          %458 = vmatprep.subr.mxu0 0.0
          %459 = vmatpush1.msra.mxu0 0.0
          %460 = vmatprep.subr.mxu0 0.0
          %461 = vmatpush1.msra.mxu0 0.0
          %462 = vmatprep.subr.mxu0 0.0
          %463 = vmatpush1.msra.mxu0 0.0
          %464 = vmatprep.subr.mxu0 0.0
          %465 = vmatpush1.msra.mxu0 0.0
          %466 = vmatprep.mubr.f32.mxu0 0.0
          %467 = vmatmul.mubr.f32.gmra.mrb[0].mxu0 %v311
          %v468 = vpop.f32.mrb[0].mxu0
          %v469 = vadd.f32 %v400, %v468
          %v470 = vpop.f32.mrb[0].mxu0
          %471 = vmatprep.mubr.f32.mxu0 0.0
          %472 = vmatmul.mubr.f32.gmra.mrb[0].mxu0 %v314
          %v473 = vpop.f32.mrb[0].mxu0
          %v474 = vadd.f32 %v400, %v473
          %v475 = vpop.f32.mrb[0].mxu0
          %476 = vdwg.mxu0
          %v477 = vpack.c.bf16 %v388, %v383
          %vm478 = vcmask 130048
          %479 = vst.msk [vmem:[#allocation2] sm:$0xff] %vm478, %v477
          %v480 = vpack.c.bf16 %v474, %v469
          %481 = vst.msk [vmem:[#allocation3] sm:$0xff] %vm478, %v480
          %s482 = scalar_lea.vmem %s3, 32
          %v483 = vld [vmem:[%s482] sm:$0xff]
          %v484 = vld [vmem:[%s482 + $0x8] sm:$0xff]
          %v485 = vld [vmem:[%s482 + $0x10] sm:$0xff]
          %v486 = vld [vmem:[%s482 + $0x18] sm:$0xff]
          %s487 = scalar_lea.vmem %s4, 1
          %v488 = vld [vmem:[%s487] sm:$0x1]
          %v490 = vlaneseq
          %v491 = vshrl.u32 %v490, 7
          %v492 = vsub.s32 0, %v491
          %v493 = vrot.slane %v488, %v492
          %495 = vmatprep.subr.mxu0 0.0
          %496 = vmatpush1.msra.mxu0 %v483
          %497 = vmatprep.subr.mxu0 0.0
          %498 = vmatpush1.msra.mxu0 %v484
          %499 = vmatprep.subr.mxu0 0.0
          %500 = vmatpush1.msra.mxu0 %v485
          %501 = vmatprep.subr.mxu0 0.0
          %502 = vmatpush1.msra.mxu0 %v486
          %503 = vmatprep.subr.mxu0 0.0
          %504 = vmatpush1.msra.mxu0 0.0
          %505 = vmatprep.subr.mxu0 0.0
          %506 = vmatpush1.msra.mxu0 0.0
          %507 = vmatprep.subr.mxu0 0.0
          %508 = vmatpush1.msra.mxu0 0.0
          %509 = vmatprep.subr.mxu0 0.0
          %510 = vmatpush1.msra.mxu0 0.0
          %511 = vmatprep.subr.mxu0 0.0
          %512 = vmatpush1.msra.mxu0 0.0
          %513 = vmatprep.subr.mxu0 0.0
          %514 = vmatpush1.msra.mxu0 0.0
          %515 = vmatprep.subr.mxu0 0.0
          %516 = vmatpush1.msra.mxu0 0.0
          %517 = vmatprep.subr.mxu0 0.0
          %518 = vmatpush1.msra.mxu0 0.0
          %519 = vmatprep.subr.mxu0 0.0
          %520 = vmatpush1.msra.mxu0 0.0
          %521 = vmatprep.subr.mxu0 0.0
          %522 = vmatpush1.msra.mxu0 0.0
          %523 = vmatprep.subr.mxu0 0.0
          %524 = vmatpush1.msra.mxu0 0.0
          %525 = vmatprep.subr.mxu0 0.0
          %526 = vmatpush1.msra.mxu0 0.0
          %527 = vmatprep.subr.mxu0 0.0
          %528 = vmatpush1.msra.mxu0 0.0
          %529 = vmatprep.subr.mxu0 0.0
          %530 = vmatpush1.msra.mxu0 0.0
          %531 = vmatprep.subr.mxu0 0.0
          %532 = vmatpush1.msra.mxu0 0.0
          %533 = vmatprep.subr.mxu0 0.0
          %534 = vmatpush1.msra.mxu0 0.0
          %535 = vmatprep.subr.mxu0 0.0
          %536 = vmatpush1.msra.mxu0 0.0
          %537 = vmatprep.subr.mxu0 0.0
          %538 = vmatpush1.msra.mxu0 0.0
          %539 = vmatprep.subr.mxu0 0.0
          %540 = vmatpush1.msra.mxu0 0.0
          %541 = vmatprep.subr.mxu0 0.0
          %542 = vmatpush1.msra.mxu0 0.0
          %543 = vmatprep.subr.mxu0 0.0
          %544 = vmatpush1.msra.mxu0 0.0
          %545 = vmatprep.subr.mxu0 0.0
          %546 = vmatpush1.msra.mxu0 0.0
          %547 = vmatprep.subr.mxu0 0.0
          %548 = vmatpush1.msra.mxu0 0.0
          %549 = vmatprep.subr.mxu0 0.0
          %550 = vmatpush1.msra.mxu0 0.0
          %551 = vmatprep.subr.mxu0 0.0
          %552 = vmatpush1.msra.mxu0 0.0
          %553 = vmatprep.subr.mxu0 0.0
          %554 = vmatpush1.msra.mxu0 0.0
          %555 = vmatprep.subr.mxu0 0.0
          %556 = vmatpush1.msra.mxu0 0.0
          %557 = vmatprep.subr.mxu0 0.0
          %558 = vmatpush1.msra.mxu0 0.0
          %559 = vmatprep.mubr.f32.mxu0 0.0
          %560 = vmatmul.mubr.f32.gmra.mrb[0].mxu0 %v311
          %v561 = vpop.f32.mrb[0].mxu0
          %v562 = vadd.f32 %v493, %v561
          %v563 = vpop.f32.mrb[0].mxu0
          %564 = vmatprep.mubr.f32.mxu0 0.0
          %565 = vmatmul.mubr.f32.gmra.mrb[0].mxu0 %v314
          %v566 = vpop.f32.mrb[0].mxu0
          %v567 = vadd.f32 %v493, %v566
          %v568 = vpop.f32.mrb[0].mxu0
          %569 = vdwg.mxu0
          %s570 = scalar_lea.vmem %s5, 32
          %v571 = vld [vmem:[%s570] sm:$0xff]
          %v572 = vld [vmem:[%s570 + $0x8] sm:$0xff]
          %v573 = vld [vmem:[%s570 + $0x10] sm:$0xff]
          %v574 = vld [vmem:[%s570 + $0x18] sm:$0xff]
          %s575 = scalar_lea.vmem %s6, 1
          %v576 = vld [vmem:[%s575] sm:$0x1]
          %v578 = vlaneseq
          %v579 = vshrl.u32 %v578, 7
          %v580 = vsub.s32 0, %v579
          %v581 = vrot.slane %v576, %v580
          %583 = vmatprep.subr.mxu0 0.0
          %584 = vmatpush1.msra.mxu0 %v571
          %585 = vmatprep.subr.mxu0 0.0
          %586 = vmatpush1.msra.mxu0 %v572
          %587 = vmatprep.subr.mxu0 0.0
          %588 = vmatpush1.msra.mxu0 %v573
          %589 = vmatprep.subr.mxu0 0.0
          %590 = vmatpush1.msra.mxu0 %v574
          %591 = vmatprep.subr.mxu0 0.0
          %592 = vmatpush1.msra.mxu0 0.0
          %593 = vmatprep.subr.mxu0 0.0
          %594 = vmatpush1.msra.mxu0 0.0
          %595 = vmatprep.subr.mxu0 0.0
          %596 = vmatpush1.msra.mxu0 0.0
          %597 = vmatprep.subr.mxu0 0.0
          %598 = vmatpush1.msra.mxu0 0.0
          %599 = vmatprep.subr.mxu0 0.0
          %600 = vmatpush1.msra.mxu0 0.0
          %601 = vmatprep.subr.mxu0 0.0
          %602 = vmatpush1.msra.mxu0 0.0
          %603 = vmatprep.subr.mxu0 0.0
          %604 = vmatpush1.msra.mxu0 0.0
          %605 = vmatprep.subr.mxu0 0.0
          %606 = vmatpush1.msra.mxu0 0.0
          %607 = vmatprep.subr.mxu0 0.0
          %608 = vmatpush1.msra.mxu0 0.0
          %609 = vmatprep.subr.mxu0 0.0
          %610 = vmatpush1.msra.mxu0 0.0
          %611 = vmatprep.subr.mxu0 0.0
          %612 = vmatpush1.msra.mxu0 0.0
          %613 = vmatprep.subr.mxu0 0.0
          %614 = vmatpush1.msra.mxu0 0.0
          %615 = vmatprep.subr.mxu0 0.0
          %616 = vmatpush1.msra.mxu0 0.0
          %617 = vmatprep.subr.mxu0 0.0
          %618 = vmatpush1.msra.mxu0 0.0
          %619 = vmatprep.subr.mxu0 0.0
          %620 = vmatpush1.msra.mxu0 0.0
          %621 = vmatprep.subr.mxu0 0.0
          %622 = vmatpush1.msra.mxu0 0.0
          %623 = vmatprep.subr.mxu0 0.0
          %624 = vmatpush1.msra.mxu0 0.0
          %625 = vmatprep.subr.mxu0 0.0
          %626 = vmatpush1.msra.mxu0 0.0
          %627 = vmatprep.subr.mxu0 0.0
          %628 = vmatpush1.msra.mxu0 0.0
          %629 = vmatprep.subr.mxu0 0.0
          %630 = vmatpush1.msra.mxu0 0.0
          %631 = vmatprep.subr.mxu0 0.0
          %632 = vmatpush1.msra.mxu0 0.0
          %633 = vmatprep.subr.mxu0 0.0
          %634 = vmatpush1.msra.mxu0 0.0
          %635 = vmatprep.subr.mxu0 0.0
          %636 = vmatpush1.msra.mxu0 0.0
          %637 = vmatprep.subr.mxu0 0.0
          %638 = vmatpush1.msra.mxu0 0.0
          %639 = vmatprep.subr.mxu0 0.0
          %640 = vmatpush1.msra.mxu0 0.0
          %641 = vmatprep.subr.mxu0 0.0
          %642 = vmatpush1.msra.mxu0 0.0
          %643 = vmatprep.subr.mxu0 0.0
          %644 = vmatpush1.msra.mxu0 0.0
          %645 = vmatprep.subr.mxu0 0.0
          %646 = vmatpush1.msra.mxu0 0.0
          %647 = vmatprep.mubr.f32.mxu0 0.0
          %648 = vmatmul.mubr.f32.gmra.mrb[0].mxu0 %v311
          %v649 = vpop.f32.mrb[0].mxu0
          %v650 = vadd.f32 %v581, %v649
          %v651 = vpop.f32.mrb[0].mxu0
          %652 = vmatprep.mubr.f32.mxu0 0.0
          %653 = vmatmul.mubr.f32.gmra.mrb[0].mxu0 %v314
          %v654 = vpop.f32.mrb[0].mxu0
          %v655 = vadd.f32 %v581, %v654
          %v656 = vpop.f32.mrb[0].mxu0
          %657 = vdwg.mxu0
          %v658 = vpack.c.bf16 %v567, %v562
          %s659 = scalar_lea.vmem [#allocation2], 8
          %660 = vst.msk [vmem:[%s659] sm:$0xff] %vm478, %v658
          %v661 = vpack.c.bf16 %v655, %v650
          %s662 = scalar_lea.vmem [#allocation3], 8
          %663 = vst.msk [vmem:[%s662] sm:$0xff] %vm478, %v661
        $region52: #{tpu_custom_call.1} parent=47 // pred_fallthru
          _
        %s664 = smul.u32 %s26, 8
        %s665 = scalar_lea.vmem %s290, %s664
        %v666 = vld [vmem:[%s665] sm:$0xff]
        %v667 = vld [vmem:[%s1] sm:$0xff]
        %v668 = vld [vmem:[%s1 + $0x8] sm:$0xff]
        %v669 = vld [vmem:[%s1 + $0x10] sm:$0xff]
        %v670 = vld [vmem:[%s1 + $0x18] sm:$0xff]
        %v671 = vld [vmem:[%s2] sm:$0x1]
        %v673 = vlaneseq
        %v674 = vshrl.u32 %v673, 7
        %v675 = vsub.s32 0, %v674
        %v676 = vrot.slane %v671, %v675
        %vm678 = vcmask 261120
        %v680 = vsel %vm678, %v666, 0
        %682 = vmatprep.subr.mxu0 0.0
        %683 = vmatpush1.msra.mxu0 %v667
        %684 = vmatprep.subr.mxu0 0.0
        %685 = vmatpush1.msra.mxu0 %v668
        %686 = vmatprep.subr.mxu0 0.0
        %687 = vmatpush1.msra.mxu0 %v669
        %688 = vmatprep.subr.mxu0 0.0
        %689 = vmatpush1.msra.mxu0 %v670
        %690 = vmatprep.subr.mxu0 0.0
        %691 = vmatpush1.msra.mxu0 0.0
        %692 = vmatprep.subr.mxu0 0.0
        %693 = vmatpush1.msra.mxu0 0.0
        %694 = vmatprep.subr.mxu0 0.0
        %695 = vmatpush1.msra.mxu0 0.0
        %696 = vmatprep.subr.mxu0 0.0
        %697 = vmatpush1.msra.mxu0 0.0
        %698 = vmatprep.subr.mxu0 0.0
        %699 = vmatpush1.msra.mxu0 0.0
        %700 = vmatprep.subr.mxu0 0.0
        %701 = vmatpush1.msra.mxu0 0.0
        %702 = vmatprep.subr.mxu0 0.0
        %703 = vmatpush1.msra.mxu0 0.0
        %704 = vmatprep.subr.mxu0 0.0
        %705 = vmatpush1.msra.mxu0 0.0
        %706 = vmatprep.subr.mxu0 0.0
        %707 = vmatpush1.msra.mxu0 0.0
        %708 = vmatprep.subr.mxu0 0.0
        %709 = vmatpush1.msra.mxu0 0.0
        %710 = vmatprep.subr.mxu0 0.0
        %711 = vmatpush1.msra.mxu0 0.0
        %712 = vmatprep.subr.mxu0 0.0
        %713 = vmatpush1.msra.mxu0 0.0
        %714 = vmatprep.subr.mxu0 0.0
        %715 = vmatpush1.msra.mxu0 0.0
        %716 = vmatprep.subr.mxu0 0.0
        %717 = vmatpush1.msra.mxu0 0.0
        %718 = vmatprep.subr.mxu0 0.0
        %719 = vmatpush1.msra.mxu0 0.0
        %720 = vmatprep.subr.mxu0 0.0
        %721 = vmatpush1.msra.mxu0 0.0
        %722 = vmatprep.subr.mxu0 0.0
        %723 = vmatpush1.msra.mxu0 0.0
        %724 = vmatprep.subr.mxu0 0.0
        %725 = vmatpush1.msra.mxu0 0.0
        %726 = vmatprep.subr.mxu0 0.0
        %727 = vmatpush1.msra.mxu0 0.0
        %728 = vmatprep.subr.mxu0 0.0
        %729 = vmatpush1.msra.mxu0 0.0
        %730 = vmatprep.subr.mxu0 0.0
        %731 = vmatpush1.msra.mxu0 0.0
        %732 = vmatprep.subr.mxu0 0.0
        %733 = vmatpush1.msra.mxu0 0.0
        %734 = vmatprep.subr.mxu0 0.0
        %735 = vmatpush1.msra.mxu0 0.0
        %736 = vmatprep.subr.mxu0 0.0
        %737 = vmatpush1.msra.mxu0 0.0
        %738 = vmatprep.subr.mxu0 0.0
        %739 = vmatpush1.msra.mxu0 0.0
        %740 = vmatprep.subr.mxu0 0.0
        %741 = vmatpush1.msra.mxu0 0.0
        %742 = vmatprep.subr.mxu0 0.0
        %743 = vmatpush1.msra.mxu0 0.0
        %744 = vmatprep.subr.mxu0 0.0
        %745 = vmatpush1.msra.mxu0 0.0
        %746 = vmatprep.mubr.f32.mxu0 0.0
        %747 = vmatmul.mubr.f32.gmra.mrb[0].mxu0 %v680
        %v748 = vpop.f32.mrb[0].mxu0
        %v749 = vadd.f32 %v676, %v748
        %v750 = vpop.f32.mrb[0].mxu0
        %751 = vdwg.mxu0
        %v752 = vpack.c.bf16 %v749, %v749
        %v753 = vld [vmem:[#allocation2] sm:$0xff]
        %v754 = vld [vmem:[#allocation3] sm:$0xff]
        %vm755 = vcmask 130048
        %v757 = vsel %vm755, %v752, 0
        %v760 = vsel %vm755, %v753, 0
        %762 = vmatprep.subr.bf16.mxu0 0
        %763 = vmatpush1.bf16.xpose.msra.mxu0 %v760
        %764 = vmatprep.subr.bf16.mxu0 0
        %765 = vmatpush1.bf16.xpose.msra.mxu0 0
        %766 = vmatprep.subr.bf16.mxu0 0
        %767 = vmatpush1.bf16.xpose.msra.mxu0 0
        %768 = vmatprep.subr.bf16.mxu0 0
        %769 = vmatpush1.bf16.xpose.msra.mxu0 0
        %770 = vmatprep.subr.bf16.mxu0 0
        %771 = vmatpush1.bf16.xpose.msra.mxu0 0
        %772 = vmatprep.subr.bf16.mxu0 0
        %773 = vmatpush1.bf16.xpose.msra.mxu0 0
        %774 = vmatprep.subr.bf16.mxu0 0
        %775 = vmatpush1.bf16.xpose.msra.mxu0 0
        %776 = vmatprep.subr.bf16.mxu0 0
        %777 = vmatpush1.bf16.xpose.msra.mxu0 0
        %778 = vmatprep.subr.bf16.mxu0 0
        %779 = vmatpush1.bf16.xpose.msra.mxu0 0
        %780 = vmatprep.subr.bf16.mxu0 0
        %781 = vmatpush1.bf16.xpose.msra.mxu0 0
        %782 = vmatprep.subr.bf16.mxu0 0
        %783 = vmatpush1.bf16.xpose.msra.mxu0 0
        %784 = vmatprep.subr.bf16.mxu0 0
        %785 = vmatpush1.bf16.xpose.msra.mxu0 0
        %786 = vmatprep.subr.bf16.mxu0 0
        %787 = vmatpush1.bf16.xpose.msra.mxu0 0
        %788 = vmatprep.subr.bf16.mxu0 0
        %789 = vmatpush1.bf16.xpose.msra.mxu0 0
        %790 = vmatprep.subr.bf16.mxu0 0
        %791 = vmatpush1.bf16.xpose.msra.mxu0 0
        %792 = vmatprep.subr.bf16.mxu0 0
        %793 = vmatpush1.bf16.xpose.msra.mxu0 0
        %794 = vmatprep.mubr.bf16.mxu0 0
        %795 = vmatmul.mubr.bf16.gmra.mrb[0].mxu0 %v757
        %v796 = vpop.f32.mrb[0].mxu0
        %v797 = vadd.f32 0.0, %v796
        %v798 = vpop.f32.mrb[0].mxu0
        %v799 = vpop.f32.mrb[0].mxu0
        %v800 = vpop.f32.mrb[0].mxu0
        %801 = vdwg.mxu0
        %v802 = vsel %vm755, %v797, -inf
        %803 = vmax.xlane.f32.xlu0 %v802
        %v804 = vpop.xlane.xlu0 %803
        %v805 = vsub.f32 %v797, %v804
        %v806 = vmul.f32 %v805, 1.442695
        %v807 = vpow.pop %v806
        %v808 = vsel %vm755, %v807, 0.0
        %809 = vadd.xlane.f32.xlu0 %v808
        %v810 = vpop.xlane.xlu0 %809
        %v811 = vrcp.pop %v810
        %v812 = vmul.f32 %v807, %v811
        %v813 = vpack.c.bf16 %v812, %v812
        %v815 = vsel %vm755, %v813, 0
        %817 = vmatprep.subr.bf16.mxu0 0
        %818 = vmatpush1.bf16.msra.mxu0 %v754
        %819 = vmatprep.subr.bf16.mxu0 0
        %820 = vmatpush1.bf16.msra.mxu0 0
        %821 = vmatprep.subr.bf16.mxu0 0
        %822 = vmatpush1.bf16.msra.mxu0 0
        %823 = vmatprep.subr.bf16.mxu0 0
        %824 = vmatpush1.bf16.msra.mxu0 0
        %825 = vmatprep.subr.bf16.mxu0 0
        %826 = vmatpush1.bf16.msra.mxu0 0
        %827 = vmatprep.subr.bf16.mxu0 0
        %828 = vmatpush1.bf16.msra.mxu0 0
        %829 = vmatprep.subr.bf16.mxu0 0
        %830 = vmatpush1.bf16.msra.mxu0 0
        %831 = vmatprep.subr.bf16.mxu0 0
        %832 = vmatpush1.bf16.msra.mxu0 0
        %833 = vmatprep.subr.bf16.mxu0 0
        %834 = vmatpush1.bf16.msra.mxu0 0
        %835 = vmatprep.subr.bf16.mxu0 0
        %836 = vmatpush1.bf16.msra.mxu0 0
        %837 = vmatprep.subr.bf16.mxu0 0
        %838 = vmatpush1.bf16.msra.mxu0 0
        %839 = vmatprep.subr.bf16.mxu0 0
        %840 = vmatpush1.bf16.msra.mxu0 0
        %841 = vmatprep.subr.bf16.mxu0 0
        %842 = vmatpush1.bf16.msra.mxu0 0
        %843 = vmatprep.subr.bf16.mxu0 0
        %844 = vmatpush1.bf16.msra.mxu0 0
        %845 = vmatprep.subr.bf16.mxu0 0
        %846 = vmatpush1.bf16.msra.mxu0 0
        %847 = vmatprep.subr.bf16.mxu0 0
        %848 = vmatpush1.bf16.msra.mxu0 0
        %849 = vmatprep.mubr.bf16.mxu0 0
        %850 = vmatmul.mubr.bf16.gmra.mrb[0].mxu0 %v815
        %v851 = vpop.f32.mrb[0].mxu0
        %v852 = vadd.f32 0.0, %v851
        %v853 = vpop.f32.mrb[0].mxu0
        %v854 = vpop.f32.mrb[0].mxu0
        %v855 = vpop.f32.mrb[0].mxu0
        %856 = vdwg.mxu0
        %s857 = scalar_lea.vmem %s1, 32
        %v858 = vld [vmem:[%s857] sm:$0xff]
        %v859 = vld [vmem:[%s857 + $0x8] sm:$0xff]
        %v860 = vld [vmem:[%s857 + $0x10] sm:$0xff]
        %v861 = vld [vmem:[%s857 + $0x18] sm:$0xff]
        %s862 = scalar_lea.vmem %s2, 1
        %v863 = vld [vmem:[%s862] sm:$0x1]
        %v865 = vlaneseq
        %v866 = vshrl.u32 %v865, 7
        %v867 = vsub.s32 0, %v866
        %v868 = vrot.slane %v863, %v867
        %870 = vmatprep.subr.mxu0 0.0
        %871 = vmatpush1.msra.mxu0 %v858
        %872 = vmatprep.subr.mxu0 0.0
        %873 = vmatpush1.msra.mxu0 %v859
        %874 = vmatprep.subr.mxu0 0.0
        %875 = vmatpush1.msra.mxu0 %v860
        %876 = vmatprep.subr.mxu0 0.0
        %877 = vmatpush1.msra.mxu0 %v861
        %878 = vmatprep.subr.mxu0 0.0
        %879 = vmatpush1.msra.mxu0 0.0
        %880 = vmatprep.subr.mxu0 0.0
        %881 = vmatpush1.msra.mxu0 0.0
        %882 = vmatprep.subr.mxu0 0.0
        %883 = vmatpush1.msra.mxu0 0.0
        %884 = vmatprep.subr.mxu0 0.0
        %885 = vmatpush1.msra.mxu0 0.0
        %886 = vmatprep.subr.mxu0 0.0
        %887 = vmatpush1.msra.mxu0 0.0
        %888 = vmatprep.subr.mxu0 0.0
        %889 = vmatpush1.msra.mxu0 0.0
        %890 = vmatprep.subr.mxu0 0.0
        %891 = vmatpush1.msra.mxu0 0.0
        %892 = vmatprep.subr.mxu0 0.0
        %893 = vmatpush1.msra.mxu0 0.0
        %894 = vmatprep.subr.mxu0 0.0
        %895 = vmatpush1.msra.mxu0 0.0
        %896 = vmatprep.subr.mxu0 0.0
        %897 = vmatpush1.msra.mxu0 0.0
        %898 = vmatprep.subr.mxu0 0.0
        %899 = vmatpush1.msra.mxu0 0.0
        %900 = vmatprep.subr.mxu0 0.0
        %901 = vmatpush1.msra.mxu0 0.0
        %902 = vmatprep.subr.mxu0 0.0
        %903 = vmatpush1.msra.mxu0 0.0
        %904 = vmatprep.subr.mxu0 0.0
        %905 = vmatpush1.msra.mxu0 0.0
        %906 = vmatprep.subr.mxu0 0.0
        %907 = vmatpush1.msra.mxu0 0.0
        %908 = vmatprep.subr.mxu0 0.0
        %909 = vmatpush1.msra.mxu0 0.0
        %910 = vmatprep.subr.mxu0 0.0
        %911 = vmatpush1.msra.mxu0 0.0
        %912 = vmatprep.subr.mxu0 0.0
        %913 = vmatpush1.msra.mxu0 0.0
        %914 = vmatprep.subr.mxu0 0.0
        %915 = vmatpush1.msra.mxu0 0.0
        %916 = vmatprep.subr.mxu0 0.0
        %917 = vmatpush1.msra.mxu0 0.0
        %918 = vmatprep.subr.mxu0 0.0
        %919 = vmatpush1.msra.mxu0 0.0
        %920 = vmatprep.subr.mxu0 0.0
        %921 = vmatpush1.msra.mxu0 0.0
        %922 = vmatprep.subr.mxu0 0.0
        %923 = vmatpush1.msra.mxu0 0.0
        %924 = vmatprep.subr.mxu0 0.0
        %925 = vmatpush1.msra.mxu0 0.0
        %926 = vmatprep.subr.mxu0 0.0
        %927 = vmatpush1.msra.mxu0 0.0
        %928 = vmatprep.subr.mxu0 0.0
        %929 = vmatpush1.msra.mxu0 0.0
        %930 = vmatprep.subr.mxu0 0.0
        %931 = vmatpush1.msra.mxu0 0.0
        %932 = vmatprep.subr.mxu0 0.0
        %933 = vmatpush1.msra.mxu0 0.0
        %934 = vmatprep.mubr.f32.mxu0 0.0
        %935 = vmatmul.mubr.f32.gmra.mrb[0].mxu0 %v680
        %v936 = vpop.f32.mrb[0].mxu0
        %v937 = vadd.f32 %v868, %v936
        %v938 = vpop.f32.mrb[0].mxu0
        %939 = vdwg.mxu0
        %v940 = vpack.c.bf16 %v937, %v937
        %s941 = scalar_lea.vmem [#allocation2], 8
        %v942 = vld [vmem:[%s941] sm:$0xff]
        %s943 = scalar_lea.vmem [#allocation3], 8
        %v944 = vld [vmem:[%s943] sm:$0xff]
        %v946 = vsel %vm755, %v940, 0
        %v949 = vsel %vm755, %v942, 0
        %951 = vmatprep.subr.bf16.mxu0 0
        %952 = vmatpush1.bf16.xpose.msra.mxu0 %v949
        %953 = vmatprep.subr.bf16.mxu0 0
        %954 = vmatpush1.bf16.xpose.msra.mxu0 0
        %955 = vmatprep.subr.bf16.mxu0 0
        %956 = vmatpush1.bf16.xpose.msra.mxu0 0
        %957 = vmatprep.subr.bf16.mxu0 0
        %958 = vmatpush1.bf16.xpose.msra.mxu0 0
        %959 = vmatprep.subr.bf16.mxu0 0
        %960 = vmatpush1.bf16.xpose.msra.mxu0 0
        %961 = vmatprep.subr.bf16.mxu0 0
        %962 = vmatpush1.bf16.xpose.msra.mxu0 0
        %963 = vmatprep.subr.bf16.mxu0 0
        %964 = vmatpush1.bf16.xpose.msra.mxu0 0
        %965 = vmatprep.subr.bf16.mxu0 0
        %966 = vmatpush1.bf16.xpose.msra.mxu0 0
        %967 = vmatprep.subr.bf16.mxu0 0
        %968 = vmatpush1.bf16.xpose.msra.mxu0 0
        %969 = vmatprep.subr.bf16.mxu0 0
        %970 = vmatpush1.bf16.xpose.msra.mxu0 0
        %971 = vmatprep.subr.bf16.mxu0 0
        %972 = vmatpush1.bf16.xpose.msra.mxu0 0
        %973 = vmatprep.subr.bf16.mxu0 0
        %974 = vmatpush1.bf16.xpose.msra.mxu0 0
        %975 = vmatprep.subr.bf16.mxu0 0
        %976 = vmatpush1.bf16.xpose.msra.mxu0 0
        %977 = vmatprep.subr.bf16.mxu0 0
        %978 = vmatpush1.bf16.xpose.msra.mxu0 0
        %979 = vmatprep.subr.bf16.mxu0 0
        %980 = vmatpush1.bf16.xpose.msra.mxu0 0
        %981 = vmatprep.subr.bf16.mxu0 0
        %982 = vmatpush1.bf16.xpose.msra.mxu0 0
        %983 = vmatprep.mubr.bf16.mxu0 0
        %984 = vmatmul.mubr.bf16.gmra.mrb[0].mxu0 %v946
        %v985 = vpop.f32.mrb[0].mxu0
        %v986 = vadd.f32 0.0, %v985
        %v987 = vpop.f32.mrb[0].mxu0
        %v988 = vpop.f32.mrb[0].mxu0
        %v989 = vpop.f32.mrb[0].mxu0
        %990 = vdwg.mxu0
        %v991 = vsel %vm755, %v986, -inf
        %992 = vmax.xlane.f32.xlu0 %v991
        %v993 = vpop.xlane.xlu0 %992
        %v994 = vsub.f32 %v986, %v993
        %v995 = vmul.f32 %v994, 1.442695
        %v996 = vpow.pop %v995
        %v997 = vsel %vm755, %v996, 0.0
        %998 = vadd.xlane.f32.xlu0 %v997
        %v999 = vpop.xlane.xlu0 %998
        %v1000 = vrcp.pop %v999
        %v1001 = vmul.f32 %v996, %v1000
        %v1002 = vpack.c.bf16 %v1001, %v1001
        %v1004 = vsel %vm755, %v1002, 0
        %1006 = vmatprep.subr.bf16.mxu0 0
        %1007 = vmatpush1.bf16.msra.mxu0 %v944
        %1008 = vmatprep.subr.bf16.mxu0 0
        %1009 = vmatpush1.bf16.msra.mxu0 0
        %1010 = vmatprep.subr.bf16.mxu0 0
        %1011 = vmatpush1.bf16.msra.mxu0 0
        %1012 = vmatprep.subr.bf16.mxu0 0
        %1013 = vmatpush1.bf16.msra.mxu0 0
        %1014 = vmatprep.subr.bf16.mxu0 0
        %1015 = vmatpush1.bf16.msra.mxu0 0
        %1016 = vmatprep.subr.bf16.mxu0 0
        %1017 = vmatpush1.bf16.msra.mxu0 0
        %1018 = vmatprep.subr.bf16.mxu0 0
        %1019 = vmatpush1.bf16.msra.mxu0 0
        %1020 = vmatprep.subr.bf16.mxu0 0
        %1021 = vmatpush1.bf16.msra.mxu0 0
        %1022 = vmatprep.subr.bf16.mxu0 0
        %1023 = vmatpush1.bf16.msra.mxu0 0
        %1024 = vmatprep.subr.bf16.mxu0 0
        %1025 = vmatpush1.bf16.msra.mxu0 0
        %1026 = vmatprep.subr.bf16.mxu0 0
        %1027 = vmatpush1.bf16.msra.mxu0 0
        %1028 = vmatprep.subr.bf16.mxu0 0
        %1029 = vmatpush1.bf16.msra.mxu0 0
        %1030 = vmatprep.subr.bf16.mxu0 0
        %1031 = vmatpush1.bf16.msra.mxu0 0
        %1032 = vmatprep.subr.bf16.mxu0 0
        %1033 = vmatpush1.bf16.msra.mxu0 0
        %1034 = vmatprep.subr.bf16.mxu0 0
        %1035 = vmatpush1.bf16.msra.mxu0 0
        %1036 = vmatprep.subr.bf16.mxu0 0
        %1037 = vmatpush1.bf16.msra.mxu0 0
        %1038 = vmatprep.mubr.bf16.mxu0 0
        %1039 = vmatmul.mubr.bf16.gmra.mrb[0].mxu0 %v1004
        %v1040 = vpop.f32.mrb[0].mxu0
        %v1041 = vadd.f32 0.0, %v1040
        %v1042 = vpop.f32.mrb[0].mxu0
        %v1043 = vpop.f32.mrb[0].mxu0
        %v1044 = vpop.f32.mrb[0].mxu0
        %1045 = vdwg.mxu0
        %1047 = vrot.lane.b32.xlu0 %v1041, 16
        %v1048 = vpop.permute.xlu0 %1047
        %v1050 = vsel %vm755, %v852, %v1048
        %v1051 = vsel %vm678, %v1050, 0.0
        %1052 = vst [vmem:[%s285] sm:$0xff] %v1051
        %s1053 = sand.u32 %s195, 1
        %s1054 = scalar_lea.sflag [#allocation5], %s1053
        %s1055 = sand.u32 %s195, 1
        %s1056 = smul.addr %s1055, 8
        %s1057 = scalar_lea.vmem [#allocation4], %s1056
        // Predicated region
        $region53: #{tpu_custom_call.1} parent=47 // pred_check
          %p1058 = pneg %p205
        $region54: #{tpu_custom_call.1} parent=47 // pred_check_branch
          %1060 = sbr.rel (%p1058) target = $region56
        $region55: #{tpu_custom_call.1} parent=47 // pred_region
          %s1062 = ssub.s32 128, 128
          %1063 = vsyncadd %s1054, %s1062
          %s1064 = smul.addr %s25, 2
          %s1065 = sadd.s32 %s26, %s1064
          %s1066 = smul.addr %s1065, 128
          %s1067 = scalar_lea.hbm %s7, %s1066
          %s1069 = sshll.u32 %s1057, 4
          %s1070 = int_to_ptr.vmem [resolvable:$true] %s1069
          %1072 = dma.vmem_to_hbm [thread:$0]  %s1070, 128, %s1067, %s1054
        $region56: #{tpu_custom_call.1} parent=47 // pred_fallthru
          _
      $region48: #{tpu_custom_call.1} parent=5 // pred_fallthru
        _
      %p1073 = scmp.le.s32.totalorder 2, %s16
      // Predicated region
      $region57: #{tpu_custom_call.1} parent=5 // pred_check
        %p1074 = pneg %p1073
      $region58: #{tpu_custom_call.1} parent=5 // pred_check_branch
        %1076 = sbr.rel (%p1074) target = $region60
      $region59: #{tpu_custom_call.1} parent=5 // pred_region
        %s1077 = ssub.s32 %s16, 2
        // Predicated region
        $region61: #{tpu_custom_call.1} parent=59 // pred_check
          %p1078 = pneg %p211
        $region62: #{tpu_custom_call.1} parent=59 // pred_check_branch
          %1080 = sbr.rel (%p1078) target = $region64
        $region63: #{tpu_custom_call.1} parent=59 // pred_region
          %s1081 = sand.u32 %s196, 1
          %s1082 = scalar_lea.sflag [#allocation5], %s1081
          %s1083 = sand.u32 %s196, 1
          %s1084 = smul.addr %s1083, 8
          %s1085 = scalar_lea.vmem [#allocation4], %s1084
          %1086 = dma.done %s1082, 128
        $region64: #{tpu_custom_call.1} parent=59 // pred_fallthru
          _
      $region60: #{tpu_custom_call.1} parent=5 // pred_fallthru
        _
    $region6: #{tpu_custom_call.1} parent=1 // loop_footer
      %s20 = sadd.s32 1, %s16
    $region7: #{tpu_custom_call.1} parent=1 // loop_footer_branch
      %15 = sbr.rel target = $region3
    $region8: #{tpu_custom_call.1} parent=1 // loop_exit
      _
    %1087 = vsyncpa [#allocation5], 1
    %s1088 = scalar_lea.sflag [#allocation5], 1
    %1089 = vsyncpa %s1088, 1

</llo_original>
